<compile_context>
chip_gen: v7x
topology: tpu7x:2x2x1
jax: 0.10.0
libtpu: 0.0.40
codegen_flags: <defaults>
</compile_context>

<pallas_src>
import jax
import jax.numpy as jnp
from jax.experimental import pallas as pl
from jax.experimental.pallas import tpu as pltpu

F32 = jnp.float32
HC, WC = 8, 8          # fixed STN crop size


# -----------------------------------------------------------------------------
# Kernel 1: fused STN head (mask 1x1-conv + global-pool bbox head), one sample
# per grid step.
# -----------------------------------------------------------------------------
def _stn_kernel(xf_ref, wm_ref, bm_ref, wb_ref, bb_ref, yini_ref, raw_ref):
    C = xf_ref.shape[1]
    xf = xf_ref[0]                                        # (C, H*W)  lane-dense

    # mask = sigmoid(w_mask^T @ x + b)  via VPU broadcast-FMA (C is tiny).
    wm = wm_ref[...]                                      # (1, C)
    lin = bm_ref[...]                                     # (1, 1) -> broadcasts
    for c in range(C):                                    # static unroll
        lin = lin + wm[0:1, c:c + 1] * xf[c:c + 1, :]
    yini_ref[0] = jax.nn.sigmoid(lin).astype(yini_ref.dtype)      # (1, H*W)

    # bbox head: sigmoid(w_box^T @ mean_hw(x) + b)
    pooled = jnp.mean(xf, axis=1, keepdims=True)          # (C, 1)
    wb = wb_ref[...]                                      # (4, C)
    raw_lin = bb_ref[...]                                 # (4, 1)
    for c in range(C):
        raw_lin = raw_lin + wb[:, c:c + 1] * pooled[c:c + 1, 0:1]
    raw_ref[0] = jax.nn.sigmoid(raw_lin).astype(raw_ref.dtype)    # (4, 1)


def stn_head(x, params):
    N, C, H, W = x.shape
    HW = H * W
    xf = x.reshape(N, C, HW)                              # free reshape, no transpose
    wm = params["w_mask"].reshape(1, C)
    bm = params["b_mask"].reshape(1, 1)
    wb = params["w_box"].T                                # (4, C), tiny one-off
    bb = params["b_box"].reshape(4, 1)
    y_init_flat, raw = pl.pallas_call(
        _stn_kernel,
        out_shape=(jax.ShapeDtypeStruct((N, 1, HW), F32),
                   jax.ShapeDtypeStruct((N, 4, 1), F32)),
        grid=(N,),
        in_specs=[
            pl.BlockSpec((1, C, HW), lambda n: (n, 0, 0)),
            pl.BlockSpec((1, C), lambda n: (0, 0)),
            pl.BlockSpec((1, 1), lambda n: (0, 0)),
            pl.BlockSpec((4, C), lambda n: (0, 0)),
            pl.BlockSpec((4, 1), lambda n: (0, 0)),
        ],
        out_specs=[
            pl.BlockSpec((1, 1, HW), lambda n: (n, 0, 0)),
            pl.BlockSpec((1, 4, 1), lambda n: (n, 0, 0)),
        ],
        compiler_params=pltpu.CompilerParams(
            dimension_semantics=("parallel",)),
    )(xf, wm, bm, wb, bb)
    return y_init_flat.reshape(N, 1, H, W), raw.reshape(N, 4)


# -----------------------------------------------------------------------------
# Kernel 2: fused crop -> seg (2 x 1x1 conv) -> nearest paste-back, one sample
# per grid step.  bboxes come in via scalar prefetch (SMEM).
# -----------------------------------------------------------------------------
def _crop_seg_paste_kernel(bbox_ref, x_ref, yini_ref,
                           w1_ref, b1_ref, w2_ref, b2_ref, o_ref):
    n = pl.program_id(0)
    C = x_ref.shape[1]
    H, W = x_ref.shape[2], x_ref.shape[3]
    HID = w1_ref.shape[1]

    x1 = bbox_ref[n, 0]
    y1 = bbox_ref[n, 1]
    x2 = bbox_ref[n, 2]
    y2 = bbox_ref[n, 3]
    h = y2 - y1
    w = x2 - x1

    # ---- crop selectors, built in-registers.  "rr == y1 + floor(oh*h/HC)" is
    #      expressed as two comparisons -> no integer division, no HBM one-hots.
    oh = jax.lax.broadcasted_iota(jnp.int32, (HC, H), 0)
    rr = jax.lax.broadcasted_iota(jnp.int32, (HC, H), 1)
    Rc = (((rr - y1) * HC <= oh * h)
          & (oh * h < (rr - y1 + 1) * HC)).astype(F32)             # (HC, H)
    ow = jax.lax.broadcasted_iota(jnp.int32, (WC, W), 0)
    cc = jax.lax.broadcasted_iota(jnp.int32, (WC, W), 1)
    Cc = (((cc - x1) * WC <= ow * w)
          & (ow * w < (cc - x1 + 1) * WC)).astype(F32)             # (WC, W)

    # ---- nearest crop of all C+1 channels of [x ; y_initial]:
    #      crop_c = Rc @ img_c @ Cc^T
    crops = []
    for c in range(C + 1):
        img_c = x_ref[0, c] if c < C else yini_ref[0, 0]           # (H, W)
        t = jnp.dot(Rc, img_c, preferred_element_type=jnp.float32)         # (HC, W)
        crops.append(jax.lax.dot_general(
            t, Cc, (((1,), (1,)), ((), ())),
            preferred_element_type=jnp.float32))                   # (HC, WC)

    # ---- seg: conv1(relu) + conv2(sigmoid) fused as VPU broadcast-FMA;
    #      h1 stays in registers (never written to HBM).
    w1 = w1_ref[...]                                               # (C+1, HID)
    b1 = b1_ref[...]                                               # (1, HID)
    w2 = w2_ref[...]                                               # (HID, 1)
    y_lin = b2_ref[...]                                            # (1, 1)
    for j in range(HID):                                           # static unroll
        h_j = b1[0:1, j:j + 1]
        for c in range(C + 1):
            h_j = h_j + w1[c:c + 1, j:j + 1] * crops[c]
        y_lin = y_lin + w2[j:j + 1, 0:1] * jnp.maximum(h_j, 0.0)
    y_crop = jax.nn.sigmoid(y_lin)                                 # (HC, WC)

    # ---- paste-back:  y[n, 0, y1:y2, x1:x2] = NN-resize(y_crop, (h, w)),
    #      zeros elsewhere.  Selector again via compares only (dynamic h, w).
    r_i = jax.lax.broadcasted_iota(jnp.int32, (H, HC), 0)
    k_i = jax.lax.broadcasted_iota(jnp.int32, (H, HC), 1)
    Rp = ((r_i >= y1) & (r_i < y2)
          & (k_i * h <= (r_i - y1) * HC)
          & ((r_i - y1) * HC < (k_i + 1) * h)).astype(F32)         # (H, HC)
    c_i = jax.lax.broadcasted_iota(jnp.int32, (W, WC), 0)
    j_i = jax.lax.broadcasted_iota(jnp.int32, (W, WC), 1)
    Cp = ((c_i >= x1) & (c_i < x2)
          & (j_i * w <= (c_i - x1) * WC)
          & ((c_i - x1) * WC < (j_i + 1) * w)).astype(F32)         # (W, WC)

    t2 = jnp.dot(Rp, y_crop, preferred_element_type=jnp.float32)           # (H, WC)
    out = jax.lax.dot_general(t2, Cp, (((1,), (1,)), ((), ())),
                              preferred_element_type=jnp.float32)          # (H, W)
    o_ref[0, 0] = out.astype(o_ref.dtype)


def crop_seg_paste(x, y_initial, bboxes, params):
    N, C, H, W = x.shape
    HID = params["w_seg1"].shape[1]
    w1 = params["w_seg1"]                              # (C+1, HID)
    b1 = params["b_seg1"].reshape(1, HID)
    w2 = params["w_seg2"]                              # (HID, 1)
    b2 = params["b_seg2"].reshape(1, 1)
    return pl.pallas_call(
        _crop_seg_paste_kernel,
        out_shape=jax.ShapeDtypeStruct((N, 1, H, W), x.dtype),
        grid_spec=pltpu.PrefetchScalarGridSpec(
            num_scalar_prefetch=1,                     # bboxes -> SMEM
            grid=(N,),
            in_specs=[
                pl.BlockSpec((1, C, H, W), lambda n, bb: (n, 0, 0, 0)),
                pl.BlockSpec((1, 1, H, W), lambda n, bb: (n, 0, 0, 0)),
                pl.BlockSpec((C + 1, HID), lambda n, bb: (0, 0)),
                pl.BlockSpec((1, HID), lambda n, bb: (0, 0)),
                pl.BlockSpec((HID, 1), lambda n, bb: (0, 0)),
                pl.BlockSpec((1, 1), lambda n, bb: (0, 0)),
            ],
            out_specs=pl.BlockSpec((1, 1, H, W), lambda n, bb: (n, 0, 0, 0)),
        ),
        compiler_params=pltpu.CompilerParams(
            dimension_semantics=("parallel",)),
    )(bboxes, x, y_initial, w1, b1, w2, b2)


# -----------------------------------------------------------------------------
# Full forward: mirrors TransformedSegmentation.forward
# (output_stn_mask=True, output_theta=False -> returns (y_initial, y))
# -----------------------------------------------------------------------------
def forward(x, params, x_highres=None):
    # TODO(synk): x_highres is accepted but unused, as in typical STN usage here.
    del x_highres
    N, C, H, W = x.shape

    # ---- STN: mask + bbox head (one fused pallas_call) ----
    y_initial, raw = stn_head(x, params)                   # (N,1,H,W), (N,4)

    # ---- bbox integerisation (a handful of scalars; plain JAX glue) ----
    x1 = jnp.floor(raw[:, 0] * (W // 4)).astype(jnp.int32)
    y1 = jnp.floor(raw[:, 1] * (H // 4)).astype(jnp.int32)
    bw = (W // 2) + jnp.floor(raw[:, 2] * (W // 4)).astype(jnp.int32)
    bh = (H // 2) + jnp.floor(raw[:, 3] * (H // 4)).astype(jnp.int32)
    x2 = jnp.minimum(x1 + bw, W)
    y2 = jnp.minimum(y1 + bh, H)
    bboxes = jnp.stack([x1, y1, x2, y2], axis=1).astype(jnp.int32)  # (N, 4)

    # ---- crop + seg (2 convs) + nearest paste-back: one fused pallas_call ----
    y = crop_seg_paste(x, y_initial, bboxes, params)       # (N,1,H,W)

    return y_initial, y


def init_params(key, C, hidden):
    ks = jax.random.split(key, 4)
    return {
        "w_mask": jax.random.normal(ks[0], (C, 1), F32) * 0.5,
        "b_mask": jnp.zeros((1,), F32),
        "w_box": jax.random.normal(ks[1], (C, 4), F32) * 0.5,
        "b_box": jnp.zeros((4,), F32),
        "w_seg1": jax.random.normal(ks[2], (C + 1, hidden), F32) * 0.3,
        "b_seg1": jnp.zeros((hidden,), F32),
        "w_seg2": jax.random.normal(ks[3], (hidden, 1), F32) * 0.3,
        "b_seg2": jnp.zeros((1,), F32),
    }


if __name__ == "__main__":
    N, C, H, W = 2, 4, 16, 16
    x = jax.random.normal(jax.random.PRNGKey(0), (N, C, H, W), F32)
    params = init_params(jax.random.PRNGKey(42), C, hidden=8)

    y_initial, y = jax.jit(forward)(x, params)
    jax.block_until_ready((y_initial, y))

    assert y_initial.shape == (N, 1, H, W) and y_initial.dtype == F32
    assert y.shape == (N, 1, H, W) and y.dtype == x.dtype
    assert bool(jnp.all(jnp.isfinite(y))) and bool(jnp.all(jnp.isfinite(y_initial)))
    print("KERNEL_OK")
</pallas_src>

<mosaic_0001>
module attributes {stable_mosaic.version = 11 : i64} {
  func.func @_stn_kernel(%arg0: i32, %arg1: memref<1x4x256xf32, #tpu.memory_space<vmem>>, %arg2: memref<1x4xf32, #tpu.memory_space<vmem>>, %arg3: memref<1x1xf32, #tpu.memory_space<vmem>>, %arg4: memref<4x4xf32, #tpu.memory_space<vmem>>, %arg5: memref<4x1xf32, #tpu.memory_space<vmem>>, %arg6: memref<1x1x256xf32, #tpu.memory_space<vmem>>, %arg7: memref<1x4x1xf32, #tpu.memory_space<vmem>>) attributes {dimension_semantics = [#tpu.dimension_semantics<parallel>], iteration_bounds = array<i64: 2>, scalar_prefetch = 0 : i64, scratch_operands = 0 : i64, tpu.core_type = #tpu.core_type<tc>, window_params = [{transform_indices = @transform_0, window_bounds = array<i64: 1, 4, 256>}, {pipeline_mode = #tpu.pipeline_mode<synchronous>, transform_indices = @transform_1, window_bounds = array<i64: 1, 4>}, {pipeline_mode = #tpu.pipeline_mode<synchronous>, transform_indices = @transform_2, window_bounds = array<i64: 1, 1>}, {pipeline_mode = #tpu.pipeline_mode<synchronous>, transform_indices = @transform_3, window_bounds = array<i64: 4, 4>}, {pipeline_mode = #tpu.pipeline_mode<synchronous>, transform_indices = @transform_4, window_bounds = array<i64: 4, 1>}, {transform_indices = @transform_5, window_bounds = array<i64: 1, 1, 256>}, {transform_indices = @transform_6, window_bounds = array<i64: 1, 4, 1>}]} {
    %c0 = arith.constant 0 : index
    %c0_0 = arith.constant 0 : index
    %c0_1 = arith.constant 0 : index
    %0 = vector.load %arg1[%c0, %c0_0, %c0_1] : memref<1x4x256xf32, #tpu.memory_space<vmem>>, vector<1x4x256xf32>
    %1 = vector.shape_cast %0 : vector<1x4x256xf32> to vector<4x256xf32>
    %c0_2 = arith.constant 0 : index
    %c0_3 = arith.constant 0 : index
    %2 = vector.load %arg2[%c0_2, %c0_3] : memref<1x4xf32, #tpu.memory_space<vmem>>, vector<1x4xf32>
    %c0_4 = arith.constant 0 : index
    %c0_5 = arith.constant 0 : index
    %3 = vector.load %arg3[%c0_4, %c0_5] : memref<1x1xf32, #tpu.memory_space<vmem>>, vector<1x1xf32>
    %4 = vector.extract_strided_slice %2 {offsets = [0, 0], sizes = [1, 1], strides = [1, 1]} : vector<1x4xf32> to vector<1x1xf32>
    %5 = vector.extract_strided_slice %1 {offsets = [0, 0], sizes = [1, 256], strides = [1, 1]} : vector<4x256xf32> to vector<1x256xf32>
    %6 = vector.broadcast %4 : vector<1x1xf32> to vector<1x256xf32>
    %7 = arith.mulf %6, %5 : vector<1x256xf32>
    %8 = vector.broadcast %3 : vector<1x1xf32> to vector<1x256xf32>
    %9 = arith.addf %8, %7 : vector<1x256xf32>
    %10 = vector.extract_strided_slice %2 {offsets = [0, 1], sizes = [1, 1], strides = [1, 1]} : vector<1x4xf32> to vector<1x1xf32>
    %11 = vector.extract_strided_slice %1 {offsets = [1, 0], sizes = [1, 256], strides = [1, 1]} : vector<4x256xf32> to vector<1x256xf32>
    %12 = vector.broadcast %10 : vector<1x1xf32> to vector<1x256xf32>
    %13 = arith.mulf %12, %11 : vector<1x256xf32>
    %14 = arith.addf %9, %13 : vector<1x256xf32>
    %15 = vector.extract_strided_slice %2 {offsets = [0, 2], sizes = [1, 1], strides = [1, 1]} : vector<1x4xf32> to vector<1x1xf32>
    %16 = vector.extract_strided_slice %1 {offsets = [2, 0], sizes = [1, 256], strides = [1, 1]} : vector<4x256xf32> to vector<1x256xf32>
    %17 = vector.broadcast %15 : vector<1x1xf32> to vector<1x256xf32>
    %18 = arith.mulf %17, %16 : vector<1x256xf32>
    %19 = arith.addf %14, %18 : vector<1x256xf32>
    %20 = vector.extract_strided_slice %2 {offsets = [0, 3], sizes = [1, 1], strides = [1, 1]} : vector<1x4xf32> to vector<1x1xf32>
    %21 = vector.extract_strided_slice %1 {offsets = [3, 0], sizes = [1, 256], strides = [1, 1]} : vector<4x256xf32> to vector<1x256xf32>
    %22 = vector.broadcast %20 : vector<1x1xf32> to vector<1x256xf32>
    %23 = arith.mulf %22, %21 : vector<1x256xf32>
    %24 = arith.addf %19, %23 : vector<1x256xf32>
    %25 = arith.negf %24 : vector<1x256xf32>
    %26 = math.exp %25 : vector<1x256xf32>
    %cst = arith.constant 1.000000e+00 : f32
    %27 = vector.broadcast %cst : f32 to vector<1x256xf32>
    %28 = arith.addf %27, %26 : vector<1x256xf32>
    %29 = arith.divf %27, %28 : vector<1x256xf32>
    %c0_6 = arith.constant 0 : index
    %c0_7 = arith.constant 0 : index
    %c0_8 = arith.constant 0 : index
    %30 = vector.load %arg6[%c0_6, %c0_7, %c0_8] : memref<1x1x256xf32, #tpu.memory_space<vmem>>, vector<1x1x256xf32>
    %31 = vector.shape_cast %30 : vector<1x1x256xf32> to vector<1x256xf32>
    %32 = vector.shape_cast %29 : vector<1x256xf32> to vector<1x1x256xf32>
    tpu.vector_store %arg6[%c0_6, %c0_7, %c0_8], %32 {strides = array<i32>} : memref<1x1x256xf32, #tpu.memory_space<vmem>>, vector<1x1x256xf32>,
    %cst_9 = arith.constant dense<0.000000e+00> : vector<4xf32>
    %33 = vector.multi_reduction <add>, %1, %cst_9 [1] : vector<4x256xf32> to vector<4xf32>
    %34 = vector.shape_cast %33 : vector<4xf32> to vector<4x1xf32>
    %cst_10 = arith.constant 2.560000e+02 : f32
    %35 = vector.broadcast %cst_10 : f32 to vector<4x1xf32>
    %36 = arith.divf %34, %35 : vector<4x1xf32>
    %c0_11 = arith.constant 0 : index
    %c0_12 = arith.constant 0 : index
    %37 = vector.load %arg4[%c0_11, %c0_12] : memref<4x4xf32, #tpu.memory_space<vmem>>, vector<4x4xf32>
    %c0_13 = arith.constant 0 : index
    %c0_14 = arith.constant 0 : index
    %38 = vector.load %arg5[%c0_13, %c0_14] : memref<4x1xf32, #tpu.memory_space<vmem>>, vector<4x1xf32>
    %39 = vector.extract_strided_slice %37 {offsets = [0, 0], sizes = [4, 1], strides = [1, 1]} : vector<4x4xf32> to vector<4x1xf32>
    %40 = vector.extract_strided_slice %36 {offsets = [0, 0], sizes = [1, 1], strides = [1, 1]} : vector<4x1xf32> to vector<1x1xf32>
    %41 = vector.broadcast %40 : vector<1x1xf32> to vector<4x1xf32>
    %42 = arith.mulf %39, %41 : vector<4x1xf32>
    %43 = arith.addf %38, %42 : vector<4x1xf32>
    %44 = vector.extract_strided_slice %37 {offsets = [0, 1], sizes = [4, 1], strides = [1, 1]} : vector<4x4xf32> to vector<4x1xf32>
    %45 = vector.extract_strided_slice %36 {offsets = [1, 0], sizes = [1, 1], strides = [1, 1]} : vector<4x1xf32> to vector<1x1xf32>
    %46 = vector.broadcast %45 : vector<1x1xf32> to vector<4x1xf32>
    %47 = arith.mulf %44, %46 : vector<4x1xf32>
    %48 = arith.addf %43, %47 : vector<4x1xf32>
    %49 = vector.extract_strided_slice %37 {offsets = [0, 2], sizes = [4, 1], strides = [1, 1]} : vector<4x4xf32> to vector<4x1xf32>
    %50 = vector.extract_strided_slice %36 {offsets = [2, 0], sizes = [1, 1], strides = [1, 1]} : vector<4x1xf32> to vector<1x1xf32>
    %51 = vector.broadcast %50 : vector<1x1xf32> to vector<4x1xf32>
    %52 = arith.mulf %49, %51 : vector<4x1xf32>
    %53 = arith.addf %48, %52 : vector<4x1xf32>
    %54 = vector.extract_strided_slice %37 {offsets = [0, 3], sizes = [4, 1], strides = [1, 1]} : vector<4x4xf32> to vector<4x1xf32>
    %55 = vector.extract_strided_slice %36 {offsets = [3, 0], sizes = [1, 1], strides = [1, 1]} : vector<4x1xf32> to vector<1x1xf32>
    %56 = vector.broadcast %55 : vector<1x1xf32> to vector<4x1xf32>
    %57 = arith.mulf %54, %56 : vector<4x1xf32>
    %58 = arith.addf %53, %57 : vector<4x1xf32>
    %59 = arith.negf %58 : vector<4x1xf32>
    %60 = math.exp %59 : vector<4x1xf32>
    %cst_15 = arith.constant 1.000000e+00 : f32
    %61 = vector.broadcast %cst_15 : f32 to vector<4x1xf32>
    %62 = arith.addf %61, %60 : vector<4x1xf32>
    %63 = arith.divf %61, %62 : vector<4x1xf32>
    %c0_16 = arith.constant 0 : index
    %c0_17 = arith.constant 0 : index
    %c0_18 = arith.constant 0 : index
    %64 = vector.load %arg7[%c0_16, %c0_17, %c0_18] : memref<1x4x1xf32, #tpu.memory_space<vmem>>, vector<1x4x1xf32>
    %65 = vector.shape_cast %64 : vector<1x4x1xf32> to vector<4x1xf32>
    %66 = vector.shape_cast %63 : vector<4x1xf32> to vector<1x4x1xf32>
    tpu.vector_store %arg7[%c0_16, %c0_17, %c0_18], %66 {strides = array<i32>} : memref<1x4x1xf32, #tpu.memory_space<vmem>>, vector<1x4x1xf32>,
    return
  }
  func.func @transform_0(%arg0: i32) -> (i32, i32, i32) {
    %c0_i32 = arith.constant 0 : i32
    %c0_i32_0 = arith.constant 0 : i32
    %c0_i32_1 = arith.constant 0 : i32
    return %arg0, %c0_i32, %c0_i32_0 : i32, i32, i32
  }
  func.func @transform_1(%arg0: i32) -> (i32, i32) {
    %c0_i32 = arith.constant 0 : i32
    %c0_i32_0 = arith.constant 0 : i32
    %c0_i32_1 = arith.constant 0 : i32
    return %c0_i32, %c0_i32_0 : i32, i32
  }
  func.func @transform_2(%arg0: i32) -> (i32, i32) {
    %c0_i32 = arith.constant 0 : i32
    %c0_i32_0 = arith.constant 0 : i32
    %c0_i32_1 = arith.constant 0 : i32
    return %c0_i32, %c0_i32_0 : i32, i32
  }
  func.func @transform_3(%arg0: i32) -> (i32, i32) {
    %c0_i32 = arith.constant 0 : i32
    %c0_i32_0 = arith.constant 0 : i32
    %c0_i32_1 = arith.constant 0 : i32
    return %c0_i32, %c0_i32_0 : i32, i32
  }
  func.func @transform_4(%arg0: i32) -> (i32, i32) {
    %c0_i32 = arith.constant 0 : i32
    %c0_i32_0 = arith.constant 0 : i32
    %c0_i32_1 = arith.constant 0 : i32
    return %c0_i32, %c0_i32_0 : i32, i32
  }
  func.func @transform_5(%arg0: i32) -> (i32, i32, i32) {
    %c0_i32 = arith.constant 0 : i32
    %c0_i32_0 = arith.constant 0 : i32
    %c0_i32_1 = arith.constant 0 : i32
    return %arg0, %c0_i32, %c0_i32_0 : i32, i32, i32
  }
  func.func @transform_6(%arg0: i32) -> (i32, i32, i32) {
    %c0_i32 = arith.constant 0 : i32
    %c0_i32_0 = arith.constant 0 : i32
    %c0_i32_1 = arith.constant 0 : i32
    return %arg0, %c0_i32, %c0_i32_0 : i32, i32, i32
  }
}

module attributes {stable_mosaic.version = 11 : i64} {
  func.func @_crop_seg_paste_kernel(%arg0: i32, %arg1: memref<2x4xi32, #tpu.memory_space<smem>>, %arg2: memref<1x4x16x16xf32, #tpu.memory_space<vmem>>, %arg3: memref<1x1x16x16xf32, #tpu.memory_space<vmem>>, %arg4: memref<5x8xf32, #tpu.memory_space<vmem>>, %arg5: memref<1x8xf32, #tpu.memory_space<vmem>>, %arg6: memref<8x1xf32, #tpu.memory_space<vmem>>, %arg7: memref<1x1xf32, #tpu.memory_space<vmem>>, %arg8: memref<1x1x16x16xf32, #tpu.memory_space<vmem>>) attributes {dimension_semantics = [#tpu.dimension_semantics<parallel>], iteration_bounds = array<i64: 2>, scalar_prefetch = 1 : i64, scratch_operands = 0 : i64, tpu.core_type = #tpu.core_type<tc>, window_params = [{transform_indices = @transform_0, window_bounds = array<i64: 1, 4, 16, 16>}, {transform_indices = @transform_1, window_bounds = array<i64: 1, 1, 16, 16>}, {pipeline_mode = #tpu.pipeline_mode<synchronous>, transform_indices = @transform_2, window_bounds = array<i64: 5, 8>}, {pipeline_mode = #tpu.pipeline_mode<synchronous>, transform_indices = @transform_3, window_bounds = array<i64: 1, 8>}, {pipeline_mode = #tpu.pipeline_mode<synchronous>, transform_indices = @transform_4, window_bounds = array<i64: 8, 1>}, {pipeline_mode = #tpu.pipeline_mode<synchronous>, transform_indices = @transform_5, window_bounds = array<i64: 1, 1>}, {transform_indices = @transform_6, window_bounds = array<i64: 1, 1, 16, 16>}]} {
    %0 = arith.index_cast %arg0 : i32 to index
    %c0 = arith.constant 0 : index
    %1 = memref.load %arg1[%0, %c0] : memref<2x4xi32, #tpu.memory_space<smem>>
    %2 = arith.index_cast %arg0 : i32 to index
    %c1 = arith.constant 1 : index
    %3 = memref.load %arg1[%2, %c1] : memref<2x4xi32, #tpu.memory_space<smem>>
    %4 = arith.index_cast %arg0 : i32 to index
    %c2 = arith.constant 2 : index
    %5 = memref.load %arg1[%4, %c2] : memref<2x4xi32, #tpu.memory_space<smem>>
    %6 = arith.index_cast %arg0 : i32 to index
    %c3 = arith.constant 3 : index
    %7 = memref.load %arg1[%6, %c3] : memref<2x4xi32, #tpu.memory_space<smem>>
    %8 = arith.subi %7, %3 : i32
    %9 = arith.subi %5, %1 : i32
    %10 = tpu.iota {dimensions = array<i32: 0>} : vector<8x16xi32>
    %11 = tpu.iota {dimensions = array<i32: 1>} : vector<8x16xi32>
    %12 = vector.broadcast %3 : i32 to vector<8x16xi32>
    %13 = arith.subi %11, %12 : vector<8x16xi32>
    %c8_i32 = arith.constant 8 : i32
    %14 = vector.broadcast %c8_i32 : i32 to vector<8x16xi32>
    %15 = arith.muli %13, %14 : vector<8x16xi32>
    %16 = vector.broadcast %8 : i32 to vector<8x16xi32>
    %17 = arith.muli %10, %16 : vector<8x16xi32>
    %18 = arith.cmpi sle, %15, %17 : vector<8x16xi32>
    %19 = vector.broadcast %8 : i32 to vector<8x16xi32>
    %20 = arith.muli %10, %19 : vector<8x16xi32>
    %21 = vector.broadcast %3 : i32 to vector<8x16xi32>
    %22 = arith.subi %11, %21 : vector<8x16xi32>
    %c1_i32 = arith.constant 1 : i32
    %23 = vector.broadcast %c1_i32 : i32 to vector<8x16xi32>
    %24 = arith.addi %22, %23 : vector<8x16xi32>
    %c8_i32_0 = arith.constant 8 : i32
    %25 = vector.broadcast %c8_i32_0 : i32 to vector<8x16xi32>
    %26 = arith.muli %24, %25 : vector<8x16xi32>
    %27 = arith.cmpi slt, %20, %26 : vector<8x16xi32>
    %28 = arith.andi %18, %27 : vector<8x16xi1>
    %29 = arith.extui %28 : vector<8x16xi1> to vector<8x16xi32>
    %30 = arith.sitofp %29 : vector<8x16xi32> to vector<8x16xf32>
    %31 = tpu.iota {dimensions = array<i32: 0>} : vector<8x16xi32>
    %32 = tpu.iota {dimensions = array<i32: 1>} : vector<8x16xi32>
    %33 = vector.broadcast %1 : i32 to vector<8x16xi32>
    %34 = arith.subi %32, %33 : vector<8x16xi32>
    %c8_i32_1 = arith.constant 8 : i32
    %35 = vector.broadcast %c8_i32_1 : i32 to vector<8x16xi32>
    %36 = arith.muli %34, %35 : vector<8x16xi32>
    %37 = vector.broadcast %9 : i32 to vector<8x16xi32>
    %38 = arith.muli %31, %37 : vector<8x16xi32>
    %39 = arith.cmpi sle, %36, %38 : vector<8x16xi32>
    %40 = vector.broadcast %9 : i32 to vector<8x16xi32>
    %41 = arith.muli %31, %40 : vector<8x16xi32>
    %42 = vector.broadcast %1 : i32 to vector<8x16xi32>
    %43 = arith.subi %32, %42 : vector<8x16xi32>
    %c1_i32_2 = arith.constant 1 : i32
    %44 = vector.broadcast %c1_i32_2 : i32 to vector<8x16xi32>
    %45 = arith.addi %43, %44 : vector<8x16xi32>
    %c8_i32_3 = arith.constant 8 : i32
    %46 = vector.broadcast %c8_i32_3 : i32 to vector<8x16xi32>
    %47 = arith.muli %45, %46 : vector<8x16xi32>
    %48 = arith.cmpi slt, %41, %47 : vector<8x16xi32>
    %49 = arith.andi %39, %48 : vector<8x16xi1>
    %50 = arith.extui %49 : vector<8x16xi1> to vector<8x16xi32>
    %51 = arith.sitofp %50 : vector<8x16xi32> to vector<8x16xf32>
    %c0_4 = arith.constant 0 : index
    %c0_5 = arith.constant 0 : index
    %c0_6 = arith.constant 0 : index
    %c0_7 = arith.constant 0 : index
    %52 = vector.load %arg2[%c0_4, %c0_5, %c0_6, %c0_7] : memref<1x4x16x16xf32, #tpu.memory_space<vmem>>, vector<1x1x16x16xf32>
    %53 = vector.shape_cast %52 : vector<1x1x16x16xf32> to vector<16x16xf32>
    %cst = arith.constant dense<0.000000e+00> : vector<8x16xf32>
    %54 = tpu.matmul %30, %53, %cst {dimension_numbers = #tpu.dot_dimension_numbers<[1], [0], [0], [1], [0, 0, 1, 1], [], []>} : vector<8x16xf32>, vector<16x16xf32>, vector<8x16xf32> -> vector<8x16xf32>
    %cst_8 = arith.constant dense<0.000000e+00> : vector<8x8xf32>
    %55 = tpu.matmul %54, %51, %cst_8 {dimension_numbers = #tpu.dot_dimension_numbers<[1], [1], [0], [0], [0, 0, 1, 0], [], []>} : vector<8x16xf32>, vector<8x16xf32>, vector<8x8xf32> -> vector<8x8xf32>
    %c0_9 = arith.constant 0 : index
    %c1_10 = arith.constant 1 : index
    %c0_11 = arith.constant 0 : index
    %c0_12 = arith.constant 0 : index
    %56 = vector.load %arg2[%c0_9, %c1_10, %c0_11, %c0_12] : memref<1x4x16x16xf32, #tpu.memory_space<vmem>>, vector<1x1x16x16xf32>
    %57 = vector.shape_cast %56 : vector<1x1x16x16xf32> to vector<16x16xf32>
    %cst_13 = arith.constant dense<0.000000e+00> : vector<8x16xf32>
    %58 = tpu.matmul %30, %57, %cst_13 {dimension_numbers = #tpu.dot_dimension_numbers<[1], [0], [0], [1], [0, 0, 1, 1], [], []>} : vector<8x16xf32>, vector<16x16xf32>, vector<8x16xf32> -> vector<8x16xf32>
    %cst_14 = arith.constant dense<0.000000e+00> : vector<8x8xf32>
    %59 = tpu.matmul %58, %51, %cst_14 {dimension_numbers = #tpu.dot_dimension_numbers<[1], [1], [0], [0], [0, 0, 1, 0], [], []>} : vector<8x16xf32>, vector<8x16xf32>, vector<8x8xf32> -> vector<8x8xf32>
    %c0_15 = arith.constant 0 : index
    %c2_16 = arith.constant 2 : index
    %c0_17 = arith.constant 0 : index
    %c0_18 = arith.constant 0 : index
    %60 = vector.load %arg2[%c0_15, %c2_16, %c0_17, %c0_18] : memref<1x4x16x16xf32, #tpu.memory_space<vmem>>, vector<1x1x16x16xf32>
    %61 = vector.shape_cast %60 : vector<1x1x16x16xf32> to vector<16x16xf32>
    %cst_19 = arith.constant dense<0.000000e+00> : vector<8x16xf32>
    %62 = tpu.matmul %30, %61, %cst_19 {dimension_numbers = #tpu.dot_dimension_numbers<[1], [0], [0], [1], [0, 0, 1, 1], [], []>} : vector<8x16xf32>, vector<16x16xf32>, vector<8x16xf32> -> vector<8x16xf32>
    %cst_20 = arith.constant dense<0.000000e+00> : vector<8x8xf32>
    %63 = tpu.matmul %62, %51, %cst_20 {dimension_numbers = #tpu.dot_dimension_numbers<[1], [1], [0], [0], [0, 0, 1, 0], [], []>} : vector<8x16xf32>, vector<8x16xf32>, vector<8x8xf32> -> vector<8x8xf32>
    %c0_21 = arith.constant 0 : index
    %c3_22 = arith.constant 3 : index
    %c0_23 = arith.constant 0 : index
    %c0_24 = arith.constant 0 : index
    %64 = vector.load %arg2[%c0_21, %c3_22, %c0_23, %c0_24] : memref<1x4x16x16xf32, #tpu.memory_space<vmem>>, vector<1x1x16x16xf32>
    %65 = vector.shape_cast %64 : vector<1x1x16x16xf32> to vector<16x16xf32>
    %cst_25 = arith.constant dense<0.000000e+00> : vector<8x16xf32>
    %66 = tpu.matmul %30, %65, %cst_25 {dimension_numbers = #tpu.dot_dimension_numbers<[1], [0], [0], [1], [0, 0, 1, 1], [], []>} : vector<8x16xf32>, vector<16x16xf32>, vector<8x16xf32> -> vector<8x16xf32>
    %cst_26 = arith.constant dense<0.000000e+00> : vector<8x8xf32>
    %67 = tpu.matmul %66, %51, %cst_26 {dimension_numbers = #tpu.dot_dimension_numbers<[1], [1], [0], [0], [0, 0, 1, 0], [], []>} : vector<8x16xf32>, vector<8x16xf32>, vector<8x8xf32> -> vector<8x8xf32>
    %c0_27 = arith.constant 0 : index
    %c0_28 = arith.constant 0 : index
    %c0_29 = arith.constant 0 : index
    %c0_30 = arith.constant 0 : index
    %68 = vector.load %arg3[%c0_27, %c0_28, %c0_29, %c0_30] : memref<1x1x16x16xf32, #tpu.memory_space<vmem>>, vector<1x1x16x16xf32>
    %69 = vector.shape_cast %68 : vector<1x1x16x16xf32> to vector<16x16xf32>
    %cst_31 = arith.constant dense<0.000000e+00> : vector<8x16xf32>
    %70 = tpu.matmul %30, %69, %cst_31 {dimension_numbers = #tpu.dot_dimension_numbers<[1], [0], [0], [1], [0, 0, 1, 1], [], []>} : vector<8x16xf32>, vector<16x16xf32>, vector<8x16xf32> -> vector<8x16xf32>
    %cst_32 = arith.constant dense<0.000000e+00> : vector<8x8xf32>
    %71 = tpu.matmul %70, %51, %cst_32 {dimension_numbers = #tpu.dot_dimension_numbers<[1], [1], [0], [0], [0, 0, 1, 0], [], []>} : vector<8x16xf32>, vector<8x16xf32>, vector<8x8xf32> -> vector<8x8xf32>
    %c0_33 = arith.constant 0 : index
    %c0_34 = arith.constant 0 : index
    %72 = vector.load %arg4[%c0_33, %c0_34] : memref<5x8xf32, #tpu.memory_space<vmem>>, vector<5x8xf32>
    %c0_35 = arith.constant 0 : index
    %c0_36 = arith.constant 0 : index
    %73 = vector.load %arg5[%c0_35, %c0_36] : memref<1x8xf32, #tpu.memory_space<vmem>>, vector<1x8xf32>
    %c0_37 = arith.constant 0 : index
    %c0_38 = arith.constant 0 : index
    %74 = vector.load %arg6[%c0_37, %c0_38] : memref<8x1xf32, #tpu.memory_space<vmem>>, vector<8x1xf32>
    %c0_39 = arith.constant 0 : index
    %c0_40 = arith.constant 0 : index
    %75 = vector.load %arg7[%c0_39, %c0_40] : memref<1x1xf32, #tpu.memory_space<vmem>>, vector<1x1xf32>
    %76 = vector.extract_strided_slice %73 {offsets = [0, 0], sizes = [1, 1], strides = [1, 1]} : vector<1x8xf32> to vector<1x1xf32>
    %77 = vector.extract_strided_slice %72 {offsets = [0, 0], sizes = [1, 1], strides = [1, 1]} : vector<5x8xf32> to vector<1x1xf32>
    %78 = vector.broadcast %77 : vector<1x1xf32> to vector<8x8xf32>
    %79 = arith.mulf %78, %55 : vector<8x8xf32>
    %80 = vector.broadcast %76 : vector<1x1xf32> to vector<8x8xf32>
    %81 = arith.addf %80, %79 : vector<8x8xf32>
    %82 = vector.extract_strided_slice %72 {offsets = [1, 0], sizes = [1, 1], strides = [1, 1]} : vector<5x8xf32> to vector<1x1xf32>
    %83 = vector.broadcast %82 : vector<1x1xf32> to vector<8x8xf32>
    %84 = arith.mulf %83, %59 : vector<8x8xf32>
    %85 = arith.addf %81, %84 : vector<8x8xf32>
    %86 = vector.extract_strided_slice %72 {offsets = [2, 0], sizes = [1, 1], strides = [1, 1]} : vector<5x8xf32> to vector<1x1xf32>
    %87 = vector.broadcast %86 : vector<1x1xf32> to vector<8x8xf32>
    %88 = arith.mulf %87, %63 : vector<8x8xf32>
    %89 = arith.addf %85, %88 : vector<8x8xf32>
    %90 = vector.extract_strided_slice %72 {offsets = [3, 0], sizes = [1, 1], strides = [1, 1]} : vector<5x8xf32> to vector<1x1xf32>
    %91 = vector.broadcast %90 : vector<1x1xf32> to vector<8x8xf32>
    %92 = arith.mulf %91, %67 : vector<8x8xf32>
    %93 = arith.addf %89, %92 : vector<8x8xf32>
    %94 = vector.extract_strided_slice %72 {offsets = [4, 0], sizes = [1, 1], strides = [1, 1]} : vector<5x8xf32> to vector<1x1xf32>
    %95 = vector.broadcast %94 : vector<1x1xf32> to vector<8x8xf32>
    %96 = arith.mulf %95, %71 : vector<8x8xf32>
    %97 = arith.addf %93, %96 : vector<8x8xf32>
    %98 = vector.extract_strided_slice %74 {offsets = [0, 0], sizes = [1, 1], strides = [1, 1]} : vector<8x1xf32> to vector<1x1xf32>
    %cst_41 = arith.constant 0.000000e+00 : f32
    %99 = vector.broadcast %cst_41 : f32 to vector<8x8xf32>
    %100 = arith.maximumf %97, %99 : vector<8x8xf32>
    %101 = vector.broadcast %98 : vector<1x1xf32> to vector<8x8xf32>
    %102 = arith.mulf %101, %100 : vector<8x8xf32>
    %103 = vector.broadcast %75 : vector<1x1xf32> to vector<8x8xf32>
    %104 = arith.addf %103, %102 : vector<8x8xf32>
    %105 = vector.extract_strided_slice %73 {offsets = [0, 1], sizes = [1, 1], strides = [1, 1]} : vector<1x8xf32> to vector<1x1xf32>
    %106 = vector.extract_strided_slice %72 {offsets = [0, 1], sizes = [1, 1], strides = [1, 1]} : vector<5x8xf32> to vector<1x1xf32>
    %107 = vector.broadcast %106 : vector<1x1xf32> to vector<8x8xf32>
    %108 = arith.mulf %107, %55 : vector<8x8xf32>
    %109 = vector.broadcast %105 : vector<1x1xf32> to vector<8x8xf32>
    %110 = arith.addf %109, %108 : vector<8x8xf32>
    %111 = vector.extract_strided_slice %72 {offsets = [1, 1], sizes = [1, 1], strides = [1, 1]} : vector<5x8xf32> to vector<1x1xf32>
    %112 = vector.broadcast %111 : vector<1x1xf32> to vector<8x8xf32>
    %113 = arith.mulf %112, %59 : vector<8x8xf32>
    %114 = arith.addf %110, %113 : vector<8x8xf32>
    %115 = vector.extract_strided_slice %72 {offsets = [2, 1], sizes = [1, 1], strides = [1, 1]} : vector<5x8xf32> to vector<1x1xf32>
    %116 = vector.broadcast %115 : vector<1x1xf32> to vector<8x8xf32>
    %117 = arith.mulf %116, %63 : vector<8x8xf32>
    %118 = arith.addf %114, %117 : vector<8x8xf32>
    %119 = vector.extract_strided_slice %72 {offsets = [3, 1], sizes = [1, 1], strides = [1, 1]} : vector<5x8xf32> to vector<1x1xf32>
    %120 = vector.broadcast %119 : vector<1x1xf32> to vector<8x8xf32>
    %121 = arith.mulf %120, %67 : vector<8x8xf32>
    %122 = arith.addf %118, %121 : vector<8x8xf32>
    %123 = vector.extract_strided_slice %72 {offsets = [4, 1], sizes = [1, 1], strides = [1, 1]} : vector<5x8xf32> to vector<1x1xf32>
    %124 = vector.broadcast %123 : vector<1x1xf32> to vector<8x8xf32>
    %125 = arith.mulf %124, %71 : vector<8x8xf32>
    %126 = arith.addf %122, %125 : vector<8x8xf32>
    %127 = vector.extract_strided_slice %74 {offsets = [1, 0], sizes = [1, 1], strides = [1, 1]} : vector<8x1xf32> to vector<1x1xf32>
    %cst_42 = arith.constant 0.000000e+00 : f32
    %128 = vector.broadcast %cst_42 : f32 to vector<8x8xf32>
    %129 = arith.maximumf %126, %128 : vector<8x8xf32>
    %130 = vector.broadcast %127 : vector<1x1xf32> to vector<8x8xf32>
    %131 = arith.mulf %130, %129 : vector<8x8xf32>
    %132 = arith.addf %104, %131 : vector<8x8xf32>
    %133 = vector.extract_strided_slice %73 {offsets = [0, 2], sizes = [1, 1], strides = [1, 1]} : vector<1x8xf32> to vector<1x1xf32>
    %134 = vector.extract_strided_slice %72 {offsets = [0, 2], sizes = [1, 1], strides = [1, 1]} : vector<5x8xf32> to vector<1x1xf32>
    %135 = vector.broadcast %134 : vector<1x1xf32> to vector<8x8xf32>
    %136 = arith.mulf %135, %55 : vector<8x8xf32>
    %137 = vector.broadcast %133 : vector<1x1xf32> to vector<8x8xf32>
    %138 = arith.addf %137, %136 : vector<8x8xf32>
    %139 = vector.extract_strided_slice %72 {offsets = [1, 2], sizes = [1, 1], strides = [1, 1]} : vector<5x8xf32> to vector<1x1xf32>
    %140 = vector.broadcast %139 : vector<1x1xf32> to vector<8x8xf32>
    %141 = arith.mulf %140, %59 : vector<8x8xf32>
    %142 = arith.addf %138, %141 : vector<8x8xf32>
    %143 = vector.extract_strided_slice %72 {offsets = [2, 2], sizes = [1, 1], strides = [1, 1]} : vector<5x8xf32> to vector<1x1xf32>
    %144 = vector.broadcast %143 : vector<1x1xf32> to vector<8x8xf32>
    %145 = arith.mulf %144, %63 : vector<8x8xf32>
    %146 = arith.addf %142, %145 : vector<8x8xf32>
    %147 = vector.extract_strided_slice %72 {offsets = [3, 2], sizes = [1, 1], strides = [1, 1]} : vector<5x8xf32> to vector<1x1xf32>
    %148 = vector.broadcast %147 : vector<1x1xf32> to vector<8x8xf32>
    %149 = arith.mulf %148, %67 : vector<8x8xf32>
    %150 = arith.addf %146, %149 : vector<8x8xf32>
    %151 = vector.extract_strided_slice %72 {offsets = [4, 2], sizes = [1, 1], strides = [1, 1]} : vector<5x8xf32> to vector<1x1xf32>
    %152 = vector.broadcast %151 : vector<1x1xf32> to vector<8x8xf32>
    %153 = arith.mulf %152, %71 : vector<8x8xf32>
    %154 = arith.addf %150, %153 : vector<8x8xf32>
    %155 = vector.extract_strided_slice %74 {offsets = [2, 0], sizes = [1, 1], strides = [1, 1]} : vector<8x1xf32> to vector<1x1xf32>
    %cst_43 = arith.constant 0.000000e+00 : f32
    %156 = vector.broadcast %cst_43 : f32 to vector<8x8xf32>
    %157 = arith.maximumf %154, %156 : vector<8x8xf32>
    %158 = vector.broadcast %155 : vector<1x1xf32> to vector<8x8xf32>
    %159 = arith.mulf %158, %157 : vector<8x8xf32>
    %160 = arith.addf %132, %159 : vector<8x8xf32>
    %161 = vector.extract_strided_slice %73 {offsets = [0, 3], sizes = [1, 1], strides = [1, 1]} : vector<1x8xf32> to vector<1x1xf32>
    %162 = vector.extract_strided_slice %72 {offsets = [0, 3], sizes = [1, 1], strides = [1, 1]} : vector<5x8xf32> to vector<1x1xf32>
    %163 = vector.broadcast %162 : vector<1x1xf32> to vector<8x8xf32>
    %164 = arith.mulf %163, %55 : vector<8x8xf32>
    %165 = vector.broadcast %161 : vector<1x1xf32> to vector<8x8xf32>
    %166 = arith.addf %165, %164 : vector<8x8xf32>
    %167 = vector.extract_strided_slice %72 {offsets = [1, 3], sizes = [1, 1], strides = [1, 1]} : vector<5x8xf32> to vector<1x1xf32>
    %168 = vector.broadcast %167 : vector<1x1xf32> to vector<8x8xf32>
    %169 = arith.mulf %168, %59 : vector<8x8xf32>
    %170 = arith.addf %166, %169 : vector<8x8xf32>
    %171 = vector.extract_strided_slice %72 {offsets = [2, 3], sizes = [1, 1], strides = [1, 1]} : vector<5x8xf32> to vector<1x1xf32>
    %172 = vector.broadcast %171 : vector<1x1xf32> to vector<8x8xf32>
    %173 = arith.mulf %172, %63 : vector<8x8xf32>
    %174 = arith.addf %170, %173 : vector<8x8xf32>
    %175 = vector.extract_strided_slice %72 {offsets = [3, 3], sizes = [1, 1], strides = [1, 1]} : vector<5x8xf32> to vector<1x1xf32>
    %176 = vector.broadcast %175 : vector<1x1xf32> to vector<8x8xf32>
    %177 = arith.mulf %176, %67 : vector<8x8xf32>
    %178 = arith.addf %174, %177 : vector<8x8xf32>
    %179 = vector.extract_strided_slice %72 {offsets = [4, 3], sizes = [1, 1], strides = [1, 1]} : vector<5x8xf32> to vector<1x1xf32>
    %180 = vector.broadcast %179 : vector<1x1xf32> to vector<8x8xf32>
    %181 = arith.mulf %180, %71 : vector<8x8xf32>
    %182 = arith.addf %178, %181 : vector<8x8xf32>
    %183 = vector.extract_strided_slice %74 {offsets = [3, 0], sizes = [1, 1], strides = [1, 1]} : vector<8x1xf32> to vector<1x1xf32>
    %cst_44 = arith.constant 0.000000e+00 : f32
    %184 = vector.broadcast %cst_44 : f32 to vector<8x8xf32>
    %185 = arith.maximumf %182, %184 : vector<8x8xf32>
    %186 = vector.broadcast %183 : vector<1x1xf32> to vector<8x8xf32>
    %187 = arith.mulf %186, %185 : vector<8x8xf32>
    %188 = arith.addf %160, %187 : vector<8x8xf32>
    %189 = vector.extract_strided_slice %73 {offsets = [0, 4], sizes = [1, 1], strides = [1, 1]} : vector<1x8xf32> to vector<1x1xf32>
    %190 = vector.extract_strided_slice %72 {offsets = [0, 4], sizes = [1, 1], strides = [1, 1]} : vector<5x8xf32> to vector<1x1xf32>
    %191 = vector.broadcast %190 : vector<1x1xf32> to vector<8x8xf32>
    %192 = arith.mulf %191, %55 : vector<8x8xf32>
    %193 = vector.broadcast %189 : vector<1x1xf32> to vector<8x8xf32>
    %194 = arith.addf %193, %192 : vector<8x8xf32>
    %195 = vector.extract_strided_slice %72 {offsets = [1, 4], sizes = [1, 1], strides = [1, 1]} : vector<5x8xf32> to vector<1x1xf32>
    %196 = vector.broadcast %195 : vector<1x1xf32> to vector<8x8xf32>
    %197 = arith.mulf %196, %59 : vector<8x8xf32>
    %198 = arith.addf %194, %197 : vector<8x8xf32>
    %199 = vector.extract_strided_slice %72 {offsets = [2, 4], sizes = [1, 1], strides = [1, 1]} : vector<5x8xf32> to vector<1x1xf32>
    %200 = vector.broadcast %199 : vector<1x1xf32> to vector<8x8xf32>
    %201 = arith.mulf %200, %63 : vector<8x8xf32>
    %202 = arith.addf %198, %201 : vector<8x8xf32>
    %203 = vector.extract_strided_slice %72 {offsets = [3, 4], sizes = [1, 1], strides = [1, 1]} : vector<5x8xf32> to vector<1x1xf32>
    %204 = vector.broadcast %203 : vector<1x1xf32> to vector<8x8xf32>
    %205 = arith.mulf %204, %67 : vector<8x8xf32>
    %206 = arith.addf %202, %205 : vector<8x8xf32>
    %207 = vector.extract_strided_slice %72 {offsets = [4, 4], sizes = [1, 1], strides = [1, 1]} : vector<5x8xf32> to vector<1x1xf32>
    %208 = vector.broadcast %207 : vector<1x1xf32> to vector<8x8xf32>
    %209 = arith.mulf %208, %71 : vector<8x8xf32>
    %210 = arith.addf %206, %209 : vector<8x8xf32>
    %211 = vector.extract_strided_slice %74 {offsets = [4, 0], sizes = [1, 1], strides = [1, 1]} : vector<8x1xf32> to vector<1x1xf32>
    %cst_45 = arith.constant 0.000000e+00 : f32
    %212 = vector.broadcast %cst_45 : f32 to vector<8x8xf32>
    %213 = arith.maximumf %210, %212 : vector<8x8xf32>
    %214 = vector.broadcast %211 : vector<1x1xf32> to vector<8x8xf32>
    %215 = arith.mulf %214, %213 : vector<8x8xf32>
    %216 = arith.addf %188, %215 : vector<8x8xf32>
    %217 = vector.extract_strided_slice %73 {offsets = [0, 5], sizes = [1, 1], strides = [1, 1]} : vector<1x8xf32> to vector<1x1xf32>
    %218 = vector.extract_strided_slice %72 {offsets = [0, 5], sizes = [1, 1], strides = [1, 1]} : vector<5x8xf32> to vector<1x1xf32>
    %219 = vector.broadcast %218 : vector<1x1xf32> to vector<8x8xf32>
    %220 = arith.mulf %219, %55 : vector<8x8xf32>
    %221 = vector.broadcast %217 : vector<1x1xf32> to vector<8x8xf32>
    %222 = arith.addf %221, %220 : vector<8x8xf32>
    %223 = vector.extract_strided_slice %72 {offsets = [1, 5], sizes = [1, 1], strides = [1, 1]} : vector<5x8xf32> to vector<1x1xf32>
    %224 = vector.broadcast %223 : vector<1x1xf32> to vector<8x8xf32>
    %225 = arith.mulf %224, %59 : vector<8x8xf32>
    %226 = arith.addf %222, %225 : vector<8x8xf32>
    %227 = vector.extract_strided_slice %72 {offsets = [2, 5], sizes = [1, 1], strides = [1, 1]} : vector<5x8xf32> to vector<1x1xf32>
    %228 = vector.broadcast %227 : vector<1x1xf32> to vector<8x8xf32>
    %229 = arith.mulf %228, %63 : vector<8x8xf32>
    %230 = arith.addf %226, %229 : vector<8x8xf32>
    %231 = vector.extract_strided_slice %72 {offsets = [3, 5], sizes = [1, 1], strides = [1, 1]} : vector<5x8xf32> to vector<1x1xf32>
    %232 = vector.broadcast %231 : vector<1x1xf32> to vector<8x8xf32>
    %233 = arith.mulf %232, %67 : vector<8x8xf32>
    %234 = arith.addf %230, %233 : vector<8x8xf32>
    %235 = vector.extract_strided_slice %72 {offsets = [4, 5], sizes = [1, 1], strides = [1, 1]} : vector<5x8xf32> to vector<1x1xf32>
    %236 = vector.broadcast %235 : vector<1x1xf32> to vector<8x8xf32>
    %237 = arith.mulf %236, %71 : vector<8x8xf32>
    %238 = arith.addf %234, %237 : vector<8x8xf32>
    %239 = vector.extract_strided_slice %74 {offsets = [5, 0], sizes = [1, 1], strides = [1, 1]} : vector<8x1xf32> to vector<1x1xf32>
    %cst_46 = arith.constant 0.000000e+00 : f32
    %240 = vector.broadcast %cst_46 : f32 to vector<8x8xf32>
    %241 = arith.maximumf %238, %240 : vector<8x8xf32>
    %242 = vector.broadcast %239 : vector<1x1xf32> to vector<8x8xf32>
    %243 = arith.mulf %242, %241 : vector<8x8xf32>
    %244 = arith.addf %216, %243 : vector<8x8xf32>
    %245 = vector.extract_strided_slice %73 {offsets = [0, 6], sizes = [1, 1], strides = [1, 1]} : vector<1x8xf32> to vector<1x1xf32>
    %246 = vector.extract_strided_slice %72 {offsets = [0, 6], sizes = [1, 1], strides = [1, 1]} : vector<5x8xf32> to vector<1x1xf32>
    %247 = vector.broadcast %246 : vector<1x1xf32> to vector<8x8xf32>
    %248 = arith.mulf %247, %55 : vector<8x8xf32>
    %249 = vector.broadcast %245 : vector<1x1xf32> to vector<8x8xf32>
    %250 = arith.addf %249, %248 : vector<8x8xf32>
    %251 = vector.extract_strided_slice %72 {offsets = [1, 6], sizes = [1, 1], strides = [1, 1]} : vector<5x8xf32> to vector<1x1xf32>
    %252 = vector.broadcast %251 : vector<1x1xf32> to vector<8x8xf32>
    %253 = arith.mulf %252, %59 : vector<8x8xf32>
    %254 = arith.addf %250, %253 : vector<8x8xf32>
    %255 = vector.extract_strided_slice %72 {offsets = [2, 6], sizes = [1, 1], strides = [1, 1]} : vector<5x8xf32> to vector<1x1xf32>
    %256 = vector.broadcast %255 : vector<1x1xf32> to vector<8x8xf32>
    %257 = arith.mulf %256, %63 : vector<8x8xf32>
    %258 = arith.addf %254, %257 : vector<8x8xf32>
    %259 = vector.extract_strided_slice %72 {offsets = [3, 6], sizes = [1, 1], strides = [1, 1]} : vector<5x8xf32> to vector<1x1xf32>
    %260 = vector.broadcast %259 : vector<1x1xf32> to vector<8x8xf32>
    %261 = arith.mulf %260, %67 : vector<8x8xf32>
    %262 = arith.addf %258, %261 : vector<8x8xf32>
    %263 = vector.extract_strided_slice %72 {offsets = [4, 6], sizes = [1, 1], strides = [1, 1]} : vector<5x8xf32> to vector<1x1xf32>
    %264 = vector.broadcast %263 : vector<1x1xf32> to vector<8x8xf32>
    %265 = arith.mulf %264, %71 : vector<8x8xf32>
    %266 = arith.addf %262, %265 : vector<8x8xf32>
    %267 = vector.extract_strided_slice %74 {offsets = [6, 0], sizes = [1, 1], strides = [1, 1]} : vector<8x1xf32> to vector<1x1xf32>
    %cst_47 = arith.constant 0.000000e+00 : f32
    %268 = vector.broadcast %cst_47 : f32 to vector<8x8xf32>
    %269 = arith.maximumf %266, %268 : vector<8x8xf32>
    %270 = vector.broadcast %267 : vector<1x1xf32> to vector<8x8xf32>
    %271 = arith.mulf %270, %269 : vector<8x8xf32>
    %272 = arith.addf %244, %271 : vector<8x8xf32>
    %273 = vector.extract_strided_slice %73 {offsets = [0, 7], sizes = [1, 1], strides = [1, 1]} : vector<1x8xf32> to vector<1x1xf32>
    %274 = vector.extract_strided_slice %72 {offsets = [0, 7], sizes = [1, 1], strides = [1, 1]} : vector<5x8xf32> to vector<1x1xf32>
    %275 = vector.broadcast %274 : vector<1x1xf32> to vector<8x8xf32>
    %276 = arith.mulf %275, %55 : vector<8x8xf32>
    %277 = vector.broadcast %273 : vector<1x1xf32> to vector<8x8xf32>
    %278 = arith.addf %277, %276 : vector<8x8xf32>
    %279 = vector.extract_strided_slice %72 {offsets = [1, 7], sizes = [1, 1], strides = [1, 1]} : vector<5x8xf32> to vector<1x1xf32>
    %280 = vector.broadcast %279 : vector<1x1xf32> to vector<8x8xf32>
    %281 = arith.mulf %280, %59 : vector<8x8xf32>
    %282 = arith.addf %278, %281 : vector<8x8xf32>
    %283 = vector.extract_strided_slice %72 {offsets = [2, 7], sizes = [1, 1], strides = [1, 1]} : vector<5x8xf32> to vector<1x1xf32>
    %284 = vector.broadcast %283 : vector<1x1xf32> to vector<8x8xf32>
    %285 = arith.mulf %284, %63 : vector<8x8xf32>
    %286 = arith.addf %282, %285 : vector<8x8xf32>
    %287 = vector.extract_strided_slice %72 {offsets = [3, 7], sizes = [1, 1], strides = [1, 1]} : vector<5x8xf32> to vector<1x1xf32>
    %288 = vector.broadcast %287 : vector<1x1xf32> to vector<8x8xf32>
    %289 = arith.mulf %288, %67 : vector<8x8xf32>
    %290 = arith.addf %286, %289 : vector<8x8xf32>
    %291 = vector.extract_strided_slice %72 {offsets = [4, 7], sizes = [1, 1], strides = [1, 1]} : vector<5x8xf32> to vector<1x1xf32>
    %292 = vector.broadcast %291 : vector<1x1xf32> to vector<8x8xf32>
    %293 = arith.mulf %292, %71 : vector<8x8xf32>
    %294 = arith.addf %290, %293 : vector<8x8xf32>
    %295 = vector.extract_strided_slice %74 {offsets = [7, 0], sizes = [1, 1], strides = [1, 1]} : vector<8x1xf32> to vector<1x1xf32>
    %cst_48 = arith.constant 0.000000e+00 : f32
    %296 = vector.broadcast %cst_48 : f32 to vector<8x8xf32>
    %297 = arith.maximumf %294, %296 : vector<8x8xf32>
    %298 = vector.broadcast %295 : vector<1x1xf32> to vector<8x8xf32>
    %299 = arith.mulf %298, %297 : vector<8x8xf32>
    %300 = arith.addf %272, %299 : vector<8x8xf32>
    %301 = arith.negf %300 : vector<8x8xf32>
    %302 = math.exp %301 : vector<8x8xf32>
    %cst_49 = arith.constant 1.000000e+00 : f32
    %303 = vector.broadcast %cst_49 : f32 to vector<8x8xf32>
    %304 = arith.addf %303, %302 : vector<8x8xf32>
    %305 = arith.divf %303, %304 : vector<8x8xf32>
    %306 = tpu.iota {dimensions = array<i32: 0>} : vector<16x8xi32>
    %307 = tpu.iota {dimensions = array<i32: 1>} : vector<16x8xi32>
    %308 = vector.broadcast %3 : i32 to vector<16x8xi32>
    %309 = arith.cmpi sge, %306, %308 : vector<16x8xi32>
    %310 = vector.broadcast %7 : i32 to vector<16x8xi32>
    %311 = arith.cmpi slt, %306, %310 : vector<16x8xi32>
    %312 = arith.andi %309, %311 : vector<16x8xi1>
    %313 = vector.broadcast %8 : i32 to vector<16x8xi32>
    %314 = arith.muli %307, %313 : vector<16x8xi32>
    %315 = vector.broadcast %3 : i32 to vector<16x8xi32>
    %316 = arith.subi %306, %315 : vector<16x8xi32>
    %c8_i32_50 = arith.constant 8 : i32
    %317 = vector.broadcast %c8_i32_50 : i32 to vector<16x8xi32>
    %318 = arith.muli %316, %317 : vector<16x8xi32>
    %319 = arith.cmpi sle, %314, %318 : vector<16x8xi32>
    %320 = arith.andi %312, %319 : vector<16x8xi1>
    %321 = vector.broadcast %3 : i32 to vector<16x8xi32>
    %322 = arith.subi %306, %321 : vector<16x8xi32>
    %c8_i32_51 = arith.constant 8 : i32
    %323 = vector.broadcast %c8_i32_51 : i32 to vector<16x8xi32>
    %324 = arith.muli %322, %323 : vector<16x8xi32>
    %c1_i32_52 = arith.constant 1 : i32
    %325 = vector.broadcast %c1_i32_52 : i32 to vector<16x8xi32>
    %326 = arith.addi %307, %325 : vector<16x8xi32>
    %327 = vector.broadcast %8 : i32 to vector<16x8xi32>
    %328 = arith.muli %326, %327 : vector<16x8xi32>
    %329 = arith.cmpi slt, %324, %328 : vector<16x8xi32>
    %330 = arith.andi %320, %329 : vector<16x8xi1>
    %331 = arith.extui %330 : vector<16x8xi1> to vector<16x8xi32>
    %332 = arith.sitofp %331 : vector<16x8xi32> to vector<16x8xf32>
    %333 = tpu.iota {dimensions = array<i32: 0>} : vector<16x8xi32>
    %334 = tpu.iota {dimensions = array<i32: 1>} : vector<16x8xi32>
    %335 = vector.broadcast %1 : i32 to vector<16x8xi32>
    %336 = arith.cmpi sge, %333, %335 : vector<16x8xi32>
    %337 = vector.broadcast %5 : i32 to vector<16x8xi32>
    %338 = arith.cmpi slt, %333, %337 : vector<16x8xi32>
    %339 = arith.andi %336, %338 : vector<16x8xi1>
    %340 = vector.broadcast %9 : i32 to vector<16x8xi32>
    %341 = arith.muli %334, %340 : vector<16x8xi32>
    %342 = vector.broadcast %1 : i32 to vector<16x8xi32>
    %343 = arith.subi %333, %342 : vector<16x8xi32>
    %c8_i32_53 = arith.constant 8 : i32
    %344 = vector.broadcast %c8_i32_53 : i32 to vector<16x8xi32>
    %345 = arith.muli %343, %344 : vector<16x8xi32>
    %346 = arith.cmpi sle, %341, %345 : vector<16x8xi32>
    %347 = arith.andi %339, %346 : vector<16x8xi1>
    %348 = vector.broadcast %1 : i32 to vector<16x8xi32>
    %349 = arith.subi %333, %348 : vector<16x8xi32>
    %c8_i32_54 = arith.constant 8 : i32
    %350 = vector.broadcast %c8_i32_54 : i32 to vector<16x8xi32>
    %351 = arith.muli %349, %350 : vector<16x8xi32>
    %c1_i32_55 = arith.constant 1 : i32
    %352 = vector.broadcast %c1_i32_55 : i32 to vector<16x8xi32>
    %353 = arith.addi %334, %352 : vector<16x8xi32>
    %354 = vector.broadcast %9 : i32 to vector<16x8xi32>
    %355 = arith.muli %353, %354 : vector<16x8xi32>
    %356 = arith.cmpi slt, %351, %355 : vector<16x8xi32>
    %357 = arith.andi %347, %356 : vector<16x8xi1>
    %358 = arith.extui %357 : vector<16x8xi1> to vector<16x8xi32>
    %359 = arith.sitofp %358 : vector<16x8xi32> to vector<16x8xf32>
    %cst_56 = arith.constant dense<0.000000e+00> : vector<16x8xf32>
    %360 = tpu.matmul %332, %305, %cst_56 {dimension_numbers = #tpu.dot_dimension_numbers<[1], [0], [0], [1], [0, 0, 1, 1], [], []>} : vector<16x8xf32>, vector<8x8xf32>, vector<16x8xf32> -> vector<16x8xf32>
    %cst_57 = arith.constant dense<0.000000e+00> : vector<16x16xf32>
    %361 = tpu.matmul %360, %359, %cst_57 {dimension_numbers = #tpu.dot_dimension_numbers<[1], [1], [0], [0], [0, 0, 1, 0], [], []>} : vector<16x8xf32>, vector<16x8xf32>, vector<16x16xf32> -> vector<16x16xf32>
    %c0_58 = arith.constant 0 : index
    %c0_59 = arith.constant 0 : index
    %c0_60 = arith.constant 0 : index
    %c0_61 = arith.constant 0 : index
    %362 = vector.load %arg8[%c0_58, %c0_59, %c0_60, %c0_61] : memref<1x1x16x16xf32, #tpu.memory_space<vmem>>, vector<1x1x16x16xf32>
    %363 = vector.shape_cast %362 : vector<1x1x16x16xf32> to vector<16x16xf32>
    %364 = vector.shape_cast %361 : vector<16x16xf32> to vector<1x1x16x16xf32>
    tpu.vector_store %arg8[%c0_58, %c0_59, %c0_60, %c0_61], %364 {strides = array<i32>} : memref<1x1x16x16xf32, #tpu.memory_space<vmem>>, vector<1x1x16x16xf32>,
    return
  }
  func.func @transform_0(%arg0: i32, %arg1: memref<2x4xi32, #tpu.memory_space<smem>>) -> (i32, i32, i32, i32) {
    %c0_i32 = arith.constant 0 : i32
    %c0_i32_0 = arith.constant 0 : i32
    %c0_i32_1 = arith.constant 0 : i32
    %c0_i32_2 = arith.constant 0 : i32
    return %arg0, %c0_i32, %c0_i32_0, %c0_i32_1 : i32, i32, i32, i32
  }
  func.func @transform_1(%arg0: i32, %arg1: memref<2x4xi32, #tpu.memory_space<smem>>) -> (i32, i32, i32, i32) {
    %c0_i32 = arith.constant 0 : i32
    %c0_i32_0 = arith.constant 0 : i32
    %c0_i32_1 = arith.constant 0 : i32
    %c0_i32_2 = arith.constant 0 : i32
    return %arg0, %c0_i32, %c0_i32_0, %c0_i32_1 : i32, i32, i32, i32
  }
  func.func @transform_2(%arg0: i32, %arg1: memref<2x4xi32, #tpu.memory_space<smem>>) -> (i32, i32) {
    %c0_i32 = arith.constant 0 : i32
    %c0_i32_0 = arith.constant 0 : i32
    %c0_i32_1 = arith.constant 0 : i32
    return %c0_i32, %c0_i32_0 : i32, i32
  }
  func.func @transform_3(%arg0: i32, %arg1: memref<2x4xi32, #tpu.memory_space<smem>>) -> (i32, i32) {
    %c0_i32 = arith.constant 0 : i32
    %c0_i32_0 = arith.constant 0 : i32
    %c0_i32_1 = arith.constant 0 : i32
    return %c0_i32, %c0_i32_0 : i32, i32
  }
  func.func @transform_4(%arg0: i32, %arg1: memref<2x4xi32, #tpu.memory_space<smem>>) -> (i32, i32) {
    %c0_i32 = arith.constant 0 : i32
    %c0_i32_0 = arith.constant 0 : i32
    %c0_i32_1 = arith.constant 0 : i32
    return %c0_i32, %c0_i32_0 : i32, i32
  }
  func.func @transform_5(%arg0: i32, %arg1: memref<2x4xi32, #tpu.memory_space<smem>>) -> (i32, i32) {
    %c0_i32 = arith.constant 0 : i32
    %c0_i32_0 = arith.constant 0 : i32
    %c0_i32_1 = arith.constant 0 : i32
    return %c0_i32, %c0_i32_0 : i32, i32
  }
  func.func @transform_6(%arg0: i32, %arg1: memref<2x4xi32, #tpu.memory_space<smem>>) -> (i32, i32, i32, i32) {
    %c0_i32 = arith.constant 0 : i32
    %c0_i32_0 = arith.constant 0 : i32
    %c0_i32_1 = arith.constant 0 : i32
    %c0_i32_2 = arith.constant 0 : i32
    return %arg0, %c0_i32, %c0_i32_0, %c0_i32_1 : i32, i32, i32, i32
  }
}

</mosaic_0001>

<llo_original>
// kernel: forward.2
$region0: #{forward.2}
  #allocation0 [shape = 'u32[]', space=smem, size = 0x4, offset = 0x4, fixed_abs, tag = 'smem constant byte address 0x4 - core index']
  #allocation1 [shape = 'u32[144,128]{1,0:T(1,128)}', space=vmem, size = 0x12000, scoped, tag = 'internal scratch']
  #allocation2 [shape = 'f32[1,1]{1,0:T(1,128)S(1)}', space=vmem, size = 0x200, scoped, tag = 'scoped memory for forward.2']
  %s0 = inlined_call_operand.vmem [shape: f32[2,4,256], index: 0, kind: input, shape index: {}]
  %s1 = inlined_call_operand.vmem [shape: f32[1,4], index: 1, kind: input, shape index: {}]
  %s2 = inlined_call_operand.<no memory space> [shape: f32[1,1], index: 2, kind: input, shape index: {}]
  %s3 = inlined_call_operand.vmem [shape: f32[4,4], index: 3, kind: input, shape index: {}]
  %s4 = inlined_call_operand.vmem [shape: f32[4,1], index: 4, kind: input, shape index: {}]
  %s5 = inlined_call_operand.vmem [shape: f32[2,1,256], index: 5, kind: output, shape index: {0}]
  %s6 = inlined_call_operand.vmem [shape: f32[2,4,1], index: 6, kind: output, shape index: {1}]
  %7 = xla_tuple %s5, %s6
  %s8 = sld [smem:[#allocation0]]
  $region61: #{forward.2} parent=0
    _
  %s10 = ssub.s32 1, %s8
  %s11 = scalar_select 0, %s10, %s8
  %v12 = vstv %s2
  %13 = vst [vmem:[#allocation2] sm:$0x1] %v12
  loop: start=0, step=1, limit=4
  $region2: #{forward.2} parent=0 // loop_pre_header
    _
  $region3: #{forward.2} parent=0 // loop_header
    %s15 = sphi 0, %s19
    %p16 = scmp.ge.s32.totalorder %s15, 4
    %s25 = sphi 0, %s27
    %s28 = sphi 0, %s25
    %s29 = sphi 0, %s28
    %s45 = sphi 0, %s29
    %s49 = sphi 0, %s49
    %s51 = sphi 0, %s49
    %s52 = sphi 0, %s51
    %s66 = sphi 0, %s52
    %s70 = sphi 0, %s70
    %s72 = sphi 0, %s70
    %s73 = sphi 0, %s72
    %s87 = sphi 0, %s73
    %s91 = sphi 0, %s91
    %s93 = sphi 0, %s91
    %s94 = sphi 0, %s93
    %s108 = sphi 0, %s94
    %s112 = sphi 0, %s112
    %s114 = sphi 0, %s112
    %s115 = sphi 0, %s114
    %s129 = sphi 0, %s115
    %s135 = sphi 0, %s137
    %s138 = sphi 0, %s135
    %s139 = sphi 0, %s138
    %s155 = sphi 0, %s139
    %s161 = sphi 0, %s163
    %s164 = sphi 0, %s161
    %s165 = sphi 0, %s164
    %s181 = sphi 0, %s165
  $region4: #{forward.2} parent=0 // loop_header_branch
    %18 = sbr.rel (%p16) target = $region8
  $region5: #{forward.2} parent=0 // loop_body
    %s20 = ssub.s32 %s15, 1
    %s21 = ssub.s32 %s15, 2
    %s22 = sadd.s32 %s15, 1
    %s23 = ssub.s32 %s15, %s22
    %p24 = scmp.eq.s32.totalorder %s23, 0
    %s26 = sadd.s32 %s25, 1
    %s27 = scalar_select %p24, %s25, %s26
    %p30 = pneg %p24
    %p31 = scmp.eq.s32.totalorder %s15, 1
    %p32 = por %p30, %p31
    %p33 = scmp.ne.s32.totalorder %s25, %s28
    %p34 = scmp.eq.s32.totalorder %s15, 0
    %p35 = por %p33, %p34
    %p36 = scmp.ne.s32.totalorder %s25, %s28
    %p37 = scmp.eq.s32.totalorder %s20, 1
    %p38 = por %p36, %p37
    %p39 = scmp.ne.s32.totalorder %s28, %s29
    %p40 = scmp.eq.s32.totalorder %s20, 0
    %p41 = por %p39, %p40
    %p42 = scmp.ne.s32.totalorder %s28, %s29
    %p43 = scmp.eq.s32.totalorder %s21, 1
    %p44 = por %p42, %p43
    %p46 = scmp.ne.s32.totalorder %s29, %s45
    %p47 = scmp.eq.s32.totalorder %s21, 0
    %p48 = por %p46, %p47
    %s50 = sadd.s32 %s49, 1
    %p53 = scmp.eq.s32.totalorder %s15, 1
    %p54 = scmp.ne.s32.totalorder %s49, %s51
    %p55 = scmp.eq.s32.totalorder %s15, 0
    %p56 = por %p54, %p55
    %p57 = scmp.ne.s32.totalorder %s49, %s51
    %p58 = scmp.eq.s32.totalorder %s20, 1
    %p59 = por %p57, %p58
    %p60 = scmp.ne.s32.totalorder %s51, %s52
    %p61 = scmp.eq.s32.totalorder %s20, 0
    %p62 = por %p60, %p61
    %p63 = scmp.ne.s32.totalorder %s51, %s52
    %p64 = scmp.eq.s32.totalorder %s21, 1
    %p65 = por %p63, %p64
    %p67 = scmp.ne.s32.totalorder %s52, %s66
    %p68 = scmp.eq.s32.totalorder %s21, 0
    %p69 = por %p67, %p68
    %s71 = sadd.s32 %s70, 1
    %p74 = scmp.eq.s32.totalorder %s15, 1
    %p75 = scmp.ne.s32.totalorder %s70, %s72
    %p76 = scmp.eq.s32.totalorder %s15, 0
    %p77 = por %p75, %p76
    %p78 = scmp.ne.s32.totalorder %s70, %s72
    %p79 = scmp.eq.s32.totalorder %s20, 1
    %p80 = por %p78, %p79
    %p81 = scmp.ne.s32.totalorder %s72, %s73
    %p82 = scmp.eq.s32.totalorder %s20, 0
    %p83 = por %p81, %p82
    %p84 = scmp.ne.s32.totalorder %s72, %s73
    %p85 = scmp.eq.s32.totalorder %s21, 1
    %p86 = por %p84, %p85
    %p88 = scmp.ne.s32.totalorder %s73, %s87
    %p89 = scmp.eq.s32.totalorder %s21, 0
    %p90 = por %p88, %p89
    %s92 = sadd.s32 %s91, 1
    %p95 = scmp.eq.s32.totalorder %s15, 1
    %p96 = scmp.ne.s32.totalorder %s91, %s93
    %p97 = scmp.eq.s32.totalorder %s15, 0
    %p98 = por %p96, %p97
    %p99 = scmp.ne.s32.totalorder %s91, %s93
    %p100 = scmp.eq.s32.totalorder %s20, 1
    %p101 = por %p99, %p100
    %p102 = scmp.ne.s32.totalorder %s93, %s94
    %p103 = scmp.eq.s32.totalorder %s20, 0
    %p104 = por %p102, %p103
    %p105 = scmp.ne.s32.totalorder %s93, %s94
    %p106 = scmp.eq.s32.totalorder %s21, 1
    %p107 = por %p105, %p106
    %p109 = scmp.ne.s32.totalorder %s94, %s108
    %p110 = scmp.eq.s32.totalorder %s21, 0
    %p111 = por %p109, %p110
    %s113 = sadd.s32 %s112, 1
    %p116 = scmp.eq.s32.totalorder %s15, 1
    %p117 = scmp.ne.s32.totalorder %s112, %s114
    %p118 = scmp.eq.s32.totalorder %s15, 0
    %p119 = por %p117, %p118
    %p120 = scmp.ne.s32.totalorder %s112, %s114
    %p121 = scmp.eq.s32.totalorder %s20, 1
    %p122 = por %p120, %p121
    %p123 = scmp.ne.s32.totalorder %s114, %s115
    %p124 = scmp.eq.s32.totalorder %s20, 0
    %p125 = por %p123, %p124
    %p126 = scmp.ne.s32.totalorder %s114, %s115
    %p127 = scmp.eq.s32.totalorder %s21, 1
    %p128 = por %p126, %p127
    %p130 = scmp.ne.s32.totalorder %s115, %s129
    %p131 = scmp.eq.s32.totalorder %s21, 0
    %p132 = por %p130, %p131
    %s133 = ssub.s32 %s15, %s22
    %p134 = scmp.eq.s32.totalorder %s133, 0
    %s136 = sadd.s32 %s135, 1
    %s137 = scalar_select %p134, %s135, %s136
    %p140 = pneg %p134
    %p141 = scmp.eq.s32.totalorder %s15, 1
    %p142 = por %p140, %p141
    %p143 = scmp.ne.s32.totalorder %s135, %s138
    %p144 = scmp.eq.s32.totalorder %s15, 0
    %p145 = por %p143, %p144
    %p146 = scmp.ne.s32.totalorder %s135, %s138
    %p147 = scmp.eq.s32.totalorder %s20, 1
    %p148 = por %p146, %p147
    %p149 = scmp.ne.s32.totalorder %s138, %s139
    %p150 = scmp.eq.s32.totalorder %s20, 0
    %p151 = por %p149, %p150
    %p152 = scmp.ne.s32.totalorder %s138, %s139
    %p153 = scmp.eq.s32.totalorder %s21, 1
    %p154 = por %p152, %p153
    %p156 = scmp.ne.s32.totalorder %s139, %s155
    %p157 = scmp.eq.s32.totalorder %s21, 0
    %p158 = por %p156, %p157
    %s159 = ssub.s32 %s15, %s22
    %p160 = scmp.eq.s32.totalorder %s159, 0
    %s162 = sadd.s32 %s161, 1
    %s163 = scalar_select %p160, %s161, %s162
    %p166 = pneg %p160
    %p167 = scmp.eq.s32.totalorder %s15, 1
    %p168 = por %p166, %p167
    %p169 = scmp.ne.s32.totalorder %s161, %s164
    %p170 = scmp.eq.s32.totalorder %s15, 0
    %p171 = por %p169, %p170
    %p172 = scmp.ne.s32.totalorder %s161, %s164
    %p173 = scmp.eq.s32.totalorder %s20, 1
    %p174 = por %p172, %p173
    %p175 = scmp.ne.s32.totalorder %s164, %s165
    %p176 = scmp.eq.s32.totalorder %s20, 0
    %p177 = por %p175, %p176
    %p178 = scmp.ne.s32.totalorder %s164, %s165
    %p179 = scmp.eq.s32.totalorder %s21, 1
    %p180 = por %p178, %p179
    %p182 = scmp.ne.s32.totalorder %s165, %s181
    %p183 = scmp.eq.s32.totalorder %s21, 0
    %p184 = por %p182, %p183
    %p185 = scmp.le.s32.totalorder 1, %s15
    %p186 = scmp.lt.s32.totalorder %s15, 3
    %p187 = pnand %p185, %p186
    %p188 = pneg %p187
    // Predicated region
    $region9: #{forward.2} parent=5 // pred_check
      _
    $region10: #{forward.2} parent=5 // pred_check_branch
      %190 = sbr.rel (%p187) target = $region12
    $region11: #{forward.2} parent=5 // pred_region
      %s191 = ssub.s32 %s15, 1
      // Predicated region
      $region13: #{forward.2} parent=11 // pred_check
        %p192 = pneg %p62
      $region14: #{forward.2} parent=11 // pred_check_branch
        %194 = sbr.rel (%p192) target = $region16
      $region15: #{forward.2} parent=11 // pred_region
        _
      $region16: #{forward.2} parent=11 // pred_fallthru
        _
      // Predicated region
      $region17: #{forward.2} parent=11 // pred_check
        %p195 = pneg %p83
      $region18: #{forward.2} parent=11 // pred_check_branch
        %197 = sbr.rel (%p195) target = $region20
      $region19: #{forward.2} parent=11 // pred_region
        _
      $region20: #{forward.2} parent=11 // pred_fallthru
        _
      // Predicated region
      $region21: #{forward.2} parent=11 // pred_check
        %p198 = pneg %p104
      $region22: #{forward.2} parent=11 // pred_check_branch
        %200 = sbr.rel (%p198) target = $region24
      $region23: #{forward.2} parent=11 // pred_region
        _
      $region24: #{forward.2} parent=11 // pred_fallthru
        _
      // Predicated region
      $region25: #{forward.2} parent=11 // pred_check
        %p201 = pneg %p125
      $region26: #{forward.2} parent=11 // pred_check_branch
        %203 = sbr.rel (%p201) target = $region28
      $region27: #{forward.2} parent=11 // pred_region
        _
      $region28: #{forward.2} parent=11 // pred_fallthru
        _
    $region12: #{forward.2} parent=5 // pred_fallthru
      _
    %p204 = scmp.lt.s32.totalorder %s15, 2
    // Predicated region
    $region29: #{forward.2} parent=5 // pred_check
      %p205 = pneg %p204
    $region30: #{forward.2} parent=5 // pred_check_branch
      %207 = sbr.rel (%p205) target = $region32
    $region31: #{forward.2} parent=5 // pred_region
      // Predicated region
      $region33: #{forward.2} parent=31 // pred_check
        %p208 = pneg %p35
      $region34: #{forward.2} parent=31 // pred_check_branch
        %210 = sbr.rel (%p208) target = $region36
      $region35: #{forward.2} parent=31 // pred_region
        %p211 = scmp.lt.s32.totalorder %s15, 1
        %s212 = scalar_select %p211, %s15, 1
        %s213 = smul.addr %s212, 2
        %s214 = smul.addr %s213, 4
        %s215 = scalar_lea.vmem %s0, %s214
      $region36: #{forward.2} parent=31 // pred_fallthru
        _
    $region32: #{forward.2} parent=5 // pred_fallthru
      _
    %p216 = scmp.le.s32.totalorder 1, %s15
    %p217 = scmp.lt.s32.totalorder %s15, 3
    %p218 = pnand %p216, %p217
    %p219 = pneg %p218
    // Predicated region
    $region37: #{forward.2} parent=5 // pred_check
      _
    $region38: #{forward.2} parent=5 // pred_check_branch
      %221 = sbr.rel (%p218) target = $region40
    $region39: #{forward.2} parent=5 // pred_region
      %s222 = ssub.s32 %s15, 1
      %p223 = scmp.lt.s32.totalorder %s20, 1
      %s224 = scalar_select %p223, %s20, 1
      %s225 = smul.addr %s224, 2
      %s226 = smul.addr %s225, 4
      %s227 = scalar_lea.vmem %s0, %s226
      %p228 = pneg %p41
      %p229 = pneg %p38
      %p230 = pneg %p62
      %p231 = pneg %p59
      %p232 = pneg %p83
      %p233 = pneg %p80
      %p234 = pneg %p104
      %p235 = pneg %p101
      %p236 = pneg %p125
      %p237 = pneg %p122
      %p238 = pneg %p151
      %p239 = pneg %p148
      %p240 = scmp.lt.s32.totalorder %s20, 1
      %s241 = scalar_select %p240, %s20, 1
      %s242 = smul.addr %s241, 2
      %s243 = scalar_lea.vmem %s5, %s242
      %p244 = pneg %p177
      %p245 = pneg %p174
      %p246 = scmp.lt.s32.totalorder %s20, 1
      %s247 = scalar_select %p246, %s20, 1
      %s248 = smul.addr %s247, 4
      %s249 = scalar_lea.vmem %s6, %s248
      %p250 = scmp.lt.s32.totalorder %s20, 1
      %s251 = scalar_select %p250, %s20, 1
      %s252 = smul.addr %s251, 2
      %s253 = smul.addr %s252, 4
      %s254 = scalar_lea.vmem %s0, %s253
      %p255 = scmp.lt.s32.totalorder %s20, 1
      %s256 = scalar_select %p255, %s20, 1
      %s257 = smul.addr %s256, 2
      %s258 = scalar_lea.vmem %s5, %s257
      %p259 = scmp.lt.s32.totalorder %s20, 1
      %s260 = scalar_select %p259, %s20, 1
      %s261 = smul.addr %s260, 4
      %s262 = scalar_lea.vmem %s6, %s261
      %v263 = vld [vmem:[%s254] sm:$0xff]
      %v264 = vld [vmem:[%s1] sm:$0x1]
      %v265 = vld [vmem:[#allocation2] sm:$0x1]
      %267 = vset.pattern.permute.xlu0 0
      %268 = vperm.xlu0 %267, %v264
      %v269 = vpop.permute.xlu0 %268
      %v271 = vlaneseq
      %v272 = vshrl.u32 %v271, 7
      %v273 = vsub.s32 0, %v272
      %v274 = vrot.slane %v269, %v273
      %v275 = vmul.f32 %v274, %v263
      %277 = vset.pattern.permute.xlu0 0
      %278 = vperm.xlu0 %277, %v265
      %v279 = vpop.permute.xlu0 %278
      %v281 = vlaneseq
      %v282 = vshrl.u32 %v281, 7
      %v283 = vsub.s32 0, %v282
      %v284 = vrot.slane %v279, %v283
      %v285 = vadd.f32 %v284, %v275
      %286 = vset.pattern.permute.xlu0 1
      %287 = vperm.xlu0 %286, %v264
      %v288 = vpop.permute.xlu0 %287
      %v290 = vlaneseq
      %v291 = vshrl.u32 %v290, 7
      %v292 = vsub.s32 0, %v291
      %v293 = vrot.slane %v288, %v292
      %v294 = vmul.f32 %v293, %v263
      %v296 = vrot.slane %v294, 5
      %v297 = vrot.slane %v296, 4
      %v299 = vadd.f32 %v285, %v297
      %300 = vset.pattern.permute.xlu0 2
      %301 = vperm.xlu0 %300, %v264
      %v302 = vpop.permute.xlu0 %301
      %v304 = vlaneseq
      %v305 = vshrl.u32 %v304, 7
      %v306 = vsub.s32 0, %v305
      %v307 = vrot.slane %v302, %v306
      %v308 = vmul.f32 %v307, %v263
      %v310 = vrot.slane %v308, 6
      %v311 = vrot.slane %v310, 4
      %v313 = vadd.f32 %v299, %v311
      %314 = vset.pattern.permute.xlu0 3
      %315 = vperm.xlu0 %314, %v264
      %v316 = vpop.permute.xlu0 %315
      %v318 = vlaneseq
      %v319 = vshrl.u32 %v318, 7
      %v320 = vsub.s32 0, %v319
      %v321 = vrot.slane %v316, %v320
      %v322 = vmul.f32 %v321, %v263
      %v324 = vrot.slane %v322, 7
      %v325 = vrot.slane %v324, 4
      %v327 = vadd.f32 %v313, %v325
      %v328 = vxor.u32 %v327, 2147483648
      %v329 = vmul.f32 %v328, 1.442695
      %v330 = vpow.pop %v329
      %v331 = vadd.f32 %v330, 1.0
      %v332 = vrcp.pop %v331
      %v333 = vmul.f32 1.0, %v332
      %v336 = vunpack.c.l.s4 1966171168
      %v337 = vunpack.c.0.s8 %v336
      %v338 = vlaneseq
      %v339 = vshrl.u32 %v338, 7
      %v340 = vsub.s32 %v337, %v339
      %v341 = vrot.slane %v333, %v340
      %v343 = vunpack.c.l.s4 1966171168
      %v344 = vunpack.c.0.s8 %v343
      %v345 = vlaneseq
      %v346 = vshrl.u32 %v345, 7
      %v347 = vsub.s32 %v344, %v346
      %v348 = vrot.slane %v341, %v347
      %v350 = vlaneseq
      %vm351 = vcmp.ge.s32.totalorder %v350, 0
      %vm352 = vcmp.lt.s32.totalorder %v350, 256
      %vm353 = vmand %vm351, %vm352
      %354 = vst.msk [vmem:[%s258] sm:$0x3] %vm353, %v348
      %v356 = vcombine.high %v263, %v263
      %vm358 = vcmask 1043456
      %v359 = vsel %vm358, %v263, 0.0
      %v360 = vsel %vm358, %v356, 0.0
      %v361 = vadd.f32 %v359, %v360
      %362 = vadd.xlane.f32.xlu0 %v361
      %v363 = vpop.xlane.xlu0 %362
      %v364 = vrcp.pop 256.0
      %v365 = vmul.f32 %v363, %v364
      %v366 = vld [vmem:[%s3] sm:$0xf]
      %v367 = vld [vmem:[%s4] sm:$0xf]
      %v368 = vlaneseq
      %v369 = vshrl.u32 %v368, 7
      %v370 = vsub.s32 0, %v369
      %v371 = vrot.slane %v365, %v370
      %v372 = vmul.f32 %v366, %v371
      %v373 = vadd.f32 %v367, %v372
      %v374 = vlaneseq
      %v375 = vshrl.u32 %v374, 7
      %v376 = vsub.s32 1, %v375
      %v377 = vrot.slane %v365, %v376
      %v378 = vmul.f32 %v366, %v377
      %380 = vrot.lane.b32.xlu0 %v378, 127
      %v381 = vpop.permute.xlu0 %380
      %v383 = vadd.f32 %v373, %v381
      %v384 = vlaneseq
      %v385 = vshrl.u32 %v384, 7
      %v386 = vsub.s32 2, %v385
      %v387 = vrot.slane %v365, %v386
      %v388 = vmul.f32 %v366, %v387
      %390 = vrot.lane.b32.xlu0 %v388, 126
      %v391 = vpop.permute.xlu0 %390
      %v393 = vadd.f32 %v383, %v391
      %v394 = vlaneseq
      %v395 = vshrl.u32 %v394, 7
      %v396 = vsub.s32 3, %v395
      %v397 = vrot.slane %v365, %v396
      %v398 = vmul.f32 %v366, %v397
      %400 = vrot.lane.b32.xlu0 %v398, 125
      %v401 = vpop.permute.xlu0 %400
      %v403 = vadd.f32 %v393, %v401
      %v404 = vxor.u32 %v403, 2147483648
      %v405 = vmul.f32 %v404, 1.442695
      %v406 = vpow.pop %v405
      %v407 = vadd.f32 %v406, 1.0
      %v408 = vrcp.pop %v407
      %v409 = vmul.f32 1.0, %v408
      %vm410 = vcmask 3072
      %411 = vst.msk [vmem:[%s262] sm:$0xf] %vm410, %v409
      %p412 = scmp.lt.s32.totalorder %s20, 1
      %s413 = scalar_select %p412, %s20, 1
      %s414 = smul.addr %s413, 2
      %s415 = scalar_lea.vmem %s5, %s414
      %p416 = scmp.lt.s32.totalorder %s20, 1
      %s417 = scalar_select %p416, %s20, 1
      %s418 = smul.addr %s417, 4
      %s419 = scalar_lea.vmem %s6, %s418
      // Predicated region
      $region41: #{forward.2} parent=39 // pred_check
        %p420 = pneg %p148
      $region42: #{forward.2} parent=39 // pred_check_branch
        %422 = sbr.rel (%p420) target = $region44
      $region43: #{forward.2} parent=39 // pred_region
        _
      $region44: #{forward.2} parent=39 // pred_fallthru
        _
      // Predicated region
      $region45: #{forward.2} parent=39 // pred_check
        %p423 = pneg %p174
      $region46: #{forward.2} parent=39 // pred_check_branch
        %425 = sbr.rel (%p423) target = $region48
      $region47: #{forward.2} parent=39 // pred_region
        _
      $region48: #{forward.2} parent=39 // pred_fallthru
        _
    $region40: #{forward.2} parent=5 // pred_fallthru
      _
    %p426 = scmp.le.s32.totalorder 2, %s15
    // Predicated region
    $region49: #{forward.2} parent=5 // pred_check
      %p427 = pneg %p426
    $region50: #{forward.2} parent=5 // pred_check_branch
      %429 = sbr.rel (%p427) target = $region52
    $region51: #{forward.2} parent=5 // pred_region
      %s430 = ssub.s32 %s15, 2
      // Predicated region
      $region53: #{forward.2} parent=51 // pred_check
        %p431 = pneg %p154
      $region54: #{forward.2} parent=51 // pred_check_branch
        %433 = sbr.rel (%p431) target = $region56
      $region55: #{forward.2} parent=51 // pred_region
        %p434 = scmp.lt.s32.totalorder %s21, 1
        %s435 = scalar_select %p434, %s21, 1
        %s436 = smul.addr %s435, 2
        %s437 = scalar_lea.vmem %s5, %s436
      $region56: #{forward.2} parent=51 // pred_fallthru
        _
      // Predicated region
      $region57: #{forward.2} parent=51 // pred_check
        %p438 = pneg %p180
      $region58: #{forward.2} parent=51 // pred_check_branch
        %440 = sbr.rel (%p438) target = $region60
      $region59: #{forward.2} parent=51 // pred_region
        %p441 = scmp.lt.s32.totalorder %s21, 1
        %s442 = scalar_select %p441, %s21, 1
        %s443 = smul.addr %s442, 4
        %s444 = scalar_lea.vmem %s6, %s443
      $region60: #{forward.2} parent=51 // pred_fallthru
        _
    $region52: #{forward.2} parent=5 // pred_fallthru
      _
  $region6: #{forward.2} parent=0 // loop_footer
    %s19 = sadd.s32 1, %s15
  $region7: #{forward.2} parent=0 // loop_footer_branch
    %14 = sbr.rel target = $region3
  $region8: #{forward.2} parent=0 // loop_exit
    _

// kernel: forward.3
$region0: #{forward.3}
  #allocation0 [shape = 'u32[]', space=smem, size = 0x4, offset = 0x4, fixed_abs, tag = 'smem constant byte address 0x4 - core index']
  #allocation1 [shape = 'u32[144,128]{1,0:T(1,128)}', space=vmem, size = 0x12000, scoped, tag = 'internal scratch']
  #allocation2 [shape = 's32[1]{0}', space=sflag, size = 0x4, scoped, tag = 'scoped memory for forward.3']
  #allocation3 [shape = 'u8[1024]{0}', space=smem, size = 0x400, scoped, tag = 'prefetched SMEM operand 0']
  #allocation4 [shape = 'f32[1,1]{1,0:T(1,128)S(1)}', space=vmem, size = 0x200, scoped, tag = 'scoped memory for forward.3']
  %s0 = inlined_call_operand.vmem [shape: s32[2,4], index: 0, kind: input, shape index: {}]
  %s1 = inlined_call_operand.vmem [shape: f32[2,4,16,16], index: 1, kind: input, shape index: {}]
  %s2 = inlined_call_operand.vmem [shape: f32[2,1,16,16], index: 2, kind: input, shape index: {}]
  %s3 = inlined_call_operand.vmem [shape: f32[5,8], index: 3, kind: input, shape index: {}]
  %s4 = inlined_call_operand.vmem [shape: f32[1,8], index: 4, kind: input, shape index: {}]
  %s5 = inlined_call_operand.vmem [shape: f32[8,1], index: 5, kind: input, shape index: {}]
  %s6 = inlined_call_operand.<no memory space> [shape: f32[1,1], index: 6, kind: input, shape index: {}]
  %s7 = inlined_call_operand.hbm [shape: f32[2,1,16,16], index: 7, kind: output, shape index: {}]
  %s8 = sld [smem:[#allocation0]]
  $region57: #{forward.3} parent=0
    _
  %s10 = ssub.s32 1, %s8
  %s11 = scalar_select 0, %s10, %s8
  %s12 = sshll.u32 %s0, 4
  %s13 = int_to_ptr.vmem [resolvable:$true] %s12
  %15 = dma.vmem_to_smem %s13, 32, [#allocation3], [#allocation2]
  %v16 = vstv %s6
  %17 = vst [vmem:[#allocation4] sm:$0x1] %v16
  %18 = dma.done [#allocation2], 32
  %19 = sfence
  $region1: #{forward.3} parent=0
    #allocation5 [shape = 'u8[16384]{0}', space=vmem, size = 0x4000, scoped, tag = 'output window, operand 0']
    #allocation6 [shape = 's32[2]{0}', space=sflag, size = 0x8, scoped, tag = 'scoped memory for forward.3']
    %20 = vsyncpa [#allocation6], 0
    %s21 = scalar_lea.sflag [#allocation6], 1
    %22 = vsyncpa %s21, 0
    loop: start=0, step=1, limit=4
    $region2: #{forward.3} parent=1 // loop_pre_header
      _
    $region3: #{forward.3} parent=1 // loop_header
      %s24 = sphi 0, %s28
      %p25 = scmp.ge.s32.totalorder %s24, 4
      %s34 = sphi 0, %s36
      %s37 = sphi 0, %s34
      %s38 = sphi 0, %s37
      %s54 = sphi 0, %s38
      %s60 = sphi 0, %s62
      %s63 = sphi 0, %s60
      %s64 = sphi 0, %s63
      %s80 = sphi 0, %s64
      %s84 = sphi 0, %s84
      %s86 = sphi 0, %s84
      %s87 = sphi 0, %s86
      %s101 = sphi 0, %s87
      %s105 = sphi 0, %s105
      %s107 = sphi 0, %s105
      %s108 = sphi 0, %s107
      %s122 = sphi 0, %s108
      %s126 = sphi 0, %s126
      %s128 = sphi 0, %s126
      %s129 = sphi 0, %s128
      %s143 = sphi 0, %s129
      %s147 = sphi 0, %s147
      %s149 = sphi 0, %s147
      %s150 = sphi 0, %s149
      %s164 = sphi 0, %s150
      %s170 = sphi 0, %s172
      %s173 = sphi 0, %s170
      %s174 = sphi 0, %s173
      %s190 = sphi 0, %s174
    $region4: #{forward.3} parent=1 // loop_header_branch
      %27 = sbr.rel (%p25) target = $region8
    $region5: #{forward.3} parent=1 // loop_body
      %s29 = ssub.s32 %s24, 1
      %s30 = ssub.s32 %s24, 2
      %s31 = sadd.s32 %s24, 1
      %s32 = ssub.s32 %s24, %s31
      %p33 = scmp.eq.s32.totalorder %s32, 0
      %s35 = sadd.s32 %s34, 1
      %s36 = scalar_select %p33, %s34, %s35
      %p39 = pneg %p33
      %p40 = scmp.eq.s32.totalorder %s24, 1
      %p41 = por %p39, %p40
      %p42 = scmp.ne.s32.totalorder %s34, %s37
      %p43 = scmp.eq.s32.totalorder %s24, 0
      %p44 = por %p42, %p43
      %p45 = scmp.ne.s32.totalorder %s34, %s37
      %p46 = scmp.eq.s32.totalorder %s29, 1
      %p47 = por %p45, %p46
      %p48 = scmp.ne.s32.totalorder %s37, %s38
      %p49 = scmp.eq.s32.totalorder %s29, 0
      %p50 = por %p48, %p49
      %p51 = scmp.ne.s32.totalorder %s37, %s38
      %p52 = scmp.eq.s32.totalorder %s30, 1
      %p53 = por %p51, %p52
      %p55 = scmp.ne.s32.totalorder %s38, %s54
      %p56 = scmp.eq.s32.totalorder %s30, 0
      %p57 = por %p55, %p56
      %s58 = ssub.s32 %s24, %s31
      %p59 = scmp.eq.s32.totalorder %s58, 0
      %s61 = sadd.s32 %s60, 1
      %s62 = scalar_select %p59, %s60, %s61
      %p65 = pneg %p59
      %p66 = scmp.eq.s32.totalorder %s24, 1
      %p67 = por %p65, %p66
      %p68 = scmp.ne.s32.totalorder %s60, %s63
      %p69 = scmp.eq.s32.totalorder %s24, 0
      %p70 = por %p68, %p69
      %p71 = scmp.ne.s32.totalorder %s60, %s63
      %p72 = scmp.eq.s32.totalorder %s29, 1
      %p73 = por %p71, %p72
      %p74 = scmp.ne.s32.totalorder %s63, %s64
      %p75 = scmp.eq.s32.totalorder %s29, 0
      %p76 = por %p74, %p75
      %p77 = scmp.ne.s32.totalorder %s63, %s64
      %p78 = scmp.eq.s32.totalorder %s30, 1
      %p79 = por %p77, %p78
      %p81 = scmp.ne.s32.totalorder %s64, %s80
      %p82 = scmp.eq.s32.totalorder %s30, 0
      %p83 = por %p81, %p82
      %s85 = sadd.s32 %s84, 1
      %p88 = scmp.eq.s32.totalorder %s24, 1
      %p89 = scmp.ne.s32.totalorder %s84, %s86
      %p90 = scmp.eq.s32.totalorder %s24, 0
      %p91 = por %p89, %p90
      %p92 = scmp.ne.s32.totalorder %s84, %s86
      %p93 = scmp.eq.s32.totalorder %s29, 1
      %p94 = por %p92, %p93
      %p95 = scmp.ne.s32.totalorder %s86, %s87
      %p96 = scmp.eq.s32.totalorder %s29, 0
      %p97 = por %p95, %p96
      %p98 = scmp.ne.s32.totalorder %s86, %s87
      %p99 = scmp.eq.s32.totalorder %s30, 1
      %p100 = por %p98, %p99
      %p102 = scmp.ne.s32.totalorder %s87, %s101
      %p103 = scmp.eq.s32.totalorder %s30, 0
      %p104 = por %p102, %p103
      %s106 = sadd.s32 %s105, 1
      %p109 = scmp.eq.s32.totalorder %s24, 1
      %p110 = scmp.ne.s32.totalorder %s105, %s107
      %p111 = scmp.eq.s32.totalorder %s24, 0
      %p112 = por %p110, %p111
      %p113 = scmp.ne.s32.totalorder %s105, %s107
      %p114 = scmp.eq.s32.totalorder %s29, 1
      %p115 = por %p113, %p114
      %p116 = scmp.ne.s32.totalorder %s107, %s108
      %p117 = scmp.eq.s32.totalorder %s29, 0
      %p118 = por %p116, %p117
      %p119 = scmp.ne.s32.totalorder %s107, %s108
      %p120 = scmp.eq.s32.totalorder %s30, 1
      %p121 = por %p119, %p120
      %p123 = scmp.ne.s32.totalorder %s108, %s122
      %p124 = scmp.eq.s32.totalorder %s30, 0
      %p125 = por %p123, %p124
      %s127 = sadd.s32 %s126, 1
      %p130 = scmp.eq.s32.totalorder %s24, 1
      %p131 = scmp.ne.s32.totalorder %s126, %s128
      %p132 = scmp.eq.s32.totalorder %s24, 0
      %p133 = por %p131, %p132
      %p134 = scmp.ne.s32.totalorder %s126, %s128
      %p135 = scmp.eq.s32.totalorder %s29, 1
      %p136 = por %p134, %p135
      %p137 = scmp.ne.s32.totalorder %s128, %s129
      %p138 = scmp.eq.s32.totalorder %s29, 0
      %p139 = por %p137, %p138
      %p140 = scmp.ne.s32.totalorder %s128, %s129
      %p141 = scmp.eq.s32.totalorder %s30, 1
      %p142 = por %p140, %p141
      %p144 = scmp.ne.s32.totalorder %s129, %s143
      %p145 = scmp.eq.s32.totalorder %s30, 0
      %p146 = por %p144, %p145
      %s148 = sadd.s32 %s147, 1
      %p151 = scmp.eq.s32.totalorder %s24, 1
      %p152 = scmp.ne.s32.totalorder %s147, %s149
      %p153 = scmp.eq.s32.totalorder %s24, 0
      %p154 = por %p152, %p153
      %p155 = scmp.ne.s32.totalorder %s147, %s149
      %p156 = scmp.eq.s32.totalorder %s29, 1
      %p157 = por %p155, %p156
      %p158 = scmp.ne.s32.totalorder %s149, %s150
      %p159 = scmp.eq.s32.totalorder %s29, 0
      %p160 = por %p158, %p159
      %p161 = scmp.ne.s32.totalorder %s149, %s150
      %p162 = scmp.eq.s32.totalorder %s30, 1
      %p163 = por %p161, %p162
      %p165 = scmp.ne.s32.totalorder %s150, %s164
      %p166 = scmp.eq.s32.totalorder %s30, 0
      %p167 = por %p165, %p166
      %s168 = ssub.s32 %s24, %s31
      %p169 = scmp.eq.s32.totalorder %s168, 0
      %s171 = sadd.s32 %s170, 1
      %s172 = scalar_select %p169, %s170, %s171
      %p175 = pneg %p169
      %p176 = scmp.eq.s32.totalorder %s24, 1
      %p177 = por %p175, %p176
      %p178 = scmp.ne.s32.totalorder %s170, %s173
      %p179 = scmp.eq.s32.totalorder %s24, 0
      %p180 = por %p178, %p179
      %p181 = scmp.ne.s32.totalorder %s170, %s173
      %p182 = scmp.eq.s32.totalorder %s29, 1
      %p183 = por %p181, %p182
      %p184 = scmp.ne.s32.totalorder %s173, %s174
      %p185 = scmp.eq.s32.totalorder %s29, 0
      %p186 = por %p184, %p185
      %p187 = scmp.ne.s32.totalorder %s173, %s174
      %p188 = scmp.eq.s32.totalorder %s30, 1
      %p189 = por %p187, %p188
      %p191 = scmp.ne.s32.totalorder %s174, %s190
      %p192 = scmp.eq.s32.totalorder %s30, 0
      %p193 = por %p191, %p192
      %p194 = scmp.le.s32.totalorder 1, %s24
      %p195 = scmp.lt.s32.totalorder %s24, 3
      %p196 = pnand %p194, %p195
      %p197 = pneg %p196
      // Predicated region
      $region9: #{forward.3} parent=5 // pred_check
        _
      $region10: #{forward.3} parent=5 // pred_check_branch
        %199 = sbr.rel (%p196) target = $region12
      $region11: #{forward.3} parent=5 // pred_region
        %s200 = ssub.s32 %s24, 1
        // Predicated region
        $region13: #{forward.3} parent=11 // pred_check
          %p201 = pneg %p97
        $region14: #{forward.3} parent=11 // pred_check_branch
          %203 = sbr.rel (%p201) target = $region16
        $region15: #{forward.3} parent=11 // pred_region
          _
        $region16: #{forward.3} parent=11 // pred_fallthru
          _
        // Predicated region
        $region17: #{forward.3} parent=11 // pred_check
          %p204 = pneg %p118
        $region18: #{forward.3} parent=11 // pred_check_branch
          %206 = sbr.rel (%p204) target = $region20
        $region19: #{forward.3} parent=11 // pred_region
          _
        $region20: #{forward.3} parent=11 // pred_fallthru
          _
        // Predicated region
        $region21: #{forward.3} parent=11 // pred_check
          %p207 = pneg %p139
        $region22: #{forward.3} parent=11 // pred_check_branch
          %209 = sbr.rel (%p207) target = $region24
        $region23: #{forward.3} parent=11 // pred_region
          _
        $region24: #{forward.3} parent=11 // pred_fallthru
          _
        // Predicated region
        $region25: #{forward.3} parent=11 // pred_check
          %p210 = pneg %p160
        $region26: #{forward.3} parent=11 // pred_check_branch
          %212 = sbr.rel (%p210) target = $region28
        $region27: #{forward.3} parent=11 // pred_region
          _
        $region28: #{forward.3} parent=11 // pred_fallthru
          _
      $region12: #{forward.3} parent=5 // pred_fallthru
        _
      %p213 = scmp.lt.s32.totalorder %s24, 2
      // Predicated region
      $region29: #{forward.3} parent=5 // pred_check
        %p214 = pneg %p213
      $region30: #{forward.3} parent=5 // pred_check_branch
        %216 = sbr.rel (%p214) target = $region32
      $region31: #{forward.3} parent=5 // pred_region
        // Predicated region
        $region33: #{forward.3} parent=31 // pred_check
          %p217 = pneg %p44
        $region34: #{forward.3} parent=31 // pred_check_branch
          %219 = sbr.rel (%p217) target = $region36
        $region35: #{forward.3} parent=31 // pred_region
          %p220 = scmp.lt.s32.totalorder %s24, 1
          %s221 = scalar_select %p220, %s24, 1
          %s222 = smul.addr %s221, 8
          %s223 = smul.addr %s222, 8
          %s224 = scalar_lea.vmem %s1, %s223
        $region36: #{forward.3} parent=31 // pred_fallthru
          _
        // Predicated region
        $region37: #{forward.3} parent=31 // pred_check
          %p225 = pneg %p70
        $region38: #{forward.3} parent=31 // pred_check_branch
          %227 = sbr.rel (%p225) target = $region40
        $region39: #{forward.3} parent=31 // pred_region
          %p228 = scmp.lt.s32.totalorder %s24, 1
          %s229 = scalar_select %p228, %s24, 1
          %s230 = smul.addr %s229, 2
          %s231 = smul.addr %s230, 8
          %s232 = scalar_lea.vmem %s2, %s231
        $region40: #{forward.3} parent=31 // pred_fallthru
          _
      $region32: #{forward.3} parent=5 // pred_fallthru
        _
      %p233 = scmp.le.s32.totalorder 1, %s24
      %p234 = scmp.lt.s32.totalorder %s24, 3
      %p235 = pnand %p233, %p234
      %p236 = pneg %p235
      // Predicated region
      $region41: #{forward.3} parent=5 // pred_check
        _
      $region42: #{forward.3} parent=5 // pred_check_branch
        %238 = sbr.rel (%p235) target = $region44
      $region43: #{forward.3} parent=5 // pred_region
        %s239 = ssub.s32 %s24, 1
        %p240 = scmp.lt.s32.totalorder %s29, 1
        %s241 = scalar_select %p240, %s29, 1
        %s242 = smul.addr %s241, 8
        %s243 = smul.addr %s242, 8
        %s244 = scalar_lea.vmem %s1, %s243
        %p245 = pneg %p50
        %p246 = pneg %p47
        %p247 = scmp.lt.s32.totalorder %s29, 1
        %s248 = scalar_select %p247, %s29, 1
        %s249 = smul.addr %s248, 2
        %s250 = smul.addr %s249, 8
        %s251 = scalar_lea.vmem %s2, %s250
        %p252 = pneg %p76
        %p253 = pneg %p73
        %p254 = pneg %p97
        %p255 = pneg %p94
        %p256 = pneg %p118
        %p257 = pneg %p115
        %p258 = pneg %p139
        %p259 = pneg %p136
        %p260 = pneg %p160
        %p261 = pneg %p157
        %p262 = pneg %p186
        %p263 = pneg %p183
        %s264 = sand.u32 %s173, 1
        %s265 = scalar_lea.sflag [#allocation6], %s264
        %s266 = sand.u32 %s173, 1
        %s267 = smul.addr %s266, 16
        %s268 = scalar_lea.vmem [#allocation5], %s267
        %p269 = scmp.lt.s32.totalorder %s29, 1
        %s270 = scalar_select %p269, %s29, 1
        %s271 = smul.addr %s270, 8
        %s272 = smul.addr %s271, 8
        %s273 = scalar_lea.vmem %s1, %s272
        %p274 = scmp.lt.s32.totalorder %s29, 1
        %s275 = scalar_select %p274, %s29, 1
        %s276 = smul.addr %s275, 2
        %s277 = smul.addr %s276, 8
        %s278 = scalar_lea.vmem %s2, %s277
        %s279 = smul.u32 %s29, 128
        %s280 = sld [smem:[#allocation3 + %s279]]
        %s281 = sadd.s32 %s279, 1
        %s282 = sld [smem:[#allocation3 + %s281]]
        %s283 = sadd.s32 %s279, 2
        %s284 = sld [smem:[#allocation3 + %s283]]
        %s285 = sadd.s32 %s279, 3
        %s286 = sld [smem:[#allocation3 + %s285]]
        %s287 = ssub.s32 %s286, %s282
        %s288 = ssub.s32 %s284, %s280
        %v289 = vlaneseq
        %v290 = vshrl.u32 %v289, 7
        %v291 = vlaneseq
        %v292 = vand.u32 %v291, 127
        %v293 = vstv %s282
        %v294 = vsub.s32 %v292, %v293
        %v295 = vmul.u32 %v294, 8
        %v296 = vstv %s287
        %v297 = vmul.u32 %v290, %v296
        %vm298 = vcmp.le.s32.totalorder %v295, %v297
        %v299 = vadd.s32 %v294, 1
        %v300 = vmul.u32 %v299, 8
        %vm301 = vcmp.lt.s32.totalorder %v297, %v300
        %vm302 = vmand %vm298, %vm301
        %v303 = vsel %vm302, 1, 0
        %v304 = vcvt.s32.f32 %v303
        %v305 = vstv %s280
        %v306 = vsub.s32 %v292, %v305
        %v307 = vmul.u32 %v306, 8
        %v308 = vstv %s288
        %v309 = vmul.u32 %v290, %v308
        %vm310 = vcmp.le.s32.totalorder %v307, %v309
        %v311 = vadd.s32 %v306, 1
        %v312 = vmul.u32 %v311, 8
        %vm313 = vcmp.lt.s32.totalorder %v309, %v312
        %vm314 = vmand %vm310, %vm313
        %v315 = vsel %vm314, 1, 0
        %v316 = vcvt.s32.f32 %v315
        %v317 = vld [vmem:[%s273] sm:$0xff]
        %v318 = vld [vmem:[%s273 + $0x8] sm:$0xff]
        %vm319 = vcmask 130048
        %v321 = vsel %vm319, %v304, 0
        %323 = vmatprep.subr.mxu0 0.0
        %324 = vmatpush1.msra.mxu0 %v317
        %325 = vmatprep.subr.mxu0 0.0
        %326 = vmatpush1.msra.mxu0 %v318
        %327 = vmatprep.subr.mxu0 0.0
        %328 = vmatpush1.msra.mxu0 0.0
        %329 = vmatprep.subr.mxu0 0.0
        %330 = vmatpush1.msra.mxu0 0.0
        %331 = vmatprep.subr.mxu0 0.0
        %332 = vmatpush1.msra.mxu0 0.0
        %333 = vmatprep.subr.mxu0 0.0
        %334 = vmatpush1.msra.mxu0 0.0
        %335 = vmatprep.subr.mxu0 0.0
        %336 = vmatpush1.msra.mxu0 0.0
        %337 = vmatprep.subr.mxu0 0.0
        %338 = vmatpush1.msra.mxu0 0.0
        %339 = vmatprep.subr.mxu0 0.0
        %340 = vmatpush1.msra.mxu0 0.0
        %341 = vmatprep.subr.mxu0 0.0
        %342 = vmatpush1.msra.mxu0 0.0
        %343 = vmatprep.subr.mxu0 0.0
        %344 = vmatpush1.msra.mxu0 0.0
        %345 = vmatprep.subr.mxu0 0.0
        %346 = vmatpush1.msra.mxu0 0.0
        %347 = vmatprep.subr.mxu0 0.0
        %348 = vmatpush1.msra.mxu0 0.0
        %349 = vmatprep.subr.mxu0 0.0
        %350 = vmatpush1.msra.mxu0 0.0
        %351 = vmatprep.subr.mxu0 0.0
        %352 = vmatpush1.msra.mxu0 0.0
        %353 = vmatprep.subr.mxu0 0.0
        %354 = vmatpush1.msra.mxu0 0.0
        %355 = vmatprep.subr.mxu0 0.0
        %356 = vmatpush1.msra.mxu0 0.0
        %357 = vmatprep.subr.mxu0 0.0
        %358 = vmatpush1.msra.mxu0 0.0
        %359 = vmatprep.subr.mxu0 0.0
        %360 = vmatpush1.msra.mxu0 0.0
        %361 = vmatprep.subr.mxu0 0.0
        %362 = vmatpush1.msra.mxu0 0.0
        %363 = vmatprep.subr.mxu0 0.0
        %364 = vmatpush1.msra.mxu0 0.0
        %365 = vmatprep.subr.mxu0 0.0
        %366 = vmatpush1.msra.mxu0 0.0
        %367 = vmatprep.subr.mxu0 0.0
        %368 = vmatpush1.msra.mxu0 0.0
        %369 = vmatprep.subr.mxu0 0.0
        %370 = vmatpush1.msra.mxu0 0.0
        %371 = vmatprep.subr.mxu0 0.0
        %372 = vmatpush1.msra.mxu0 0.0
        %373 = vmatprep.subr.mxu0 0.0
        %374 = vmatpush1.msra.mxu0 0.0
        %375 = vmatprep.subr.mxu0 0.0
        %376 = vmatpush1.msra.mxu0 0.0
        %377 = vmatprep.subr.mxu0 0.0
        %378 = vmatpush1.msra.mxu0 0.0
        %379 = vmatprep.subr.mxu0 0.0
        %380 = vmatpush1.msra.mxu0 0.0
        %381 = vmatprep.subr.mxu0 0.0
        %382 = vmatpush1.msra.mxu0 0.0
        %383 = vmatprep.subr.mxu0 0.0
        %384 = vmatpush1.msra.mxu0 0.0
        %385 = vmatprep.subr.mxu0 0.0
        %386 = vmatpush1.msra.mxu0 0.0
        %387 = vmatprep.mubr.f32.mxu0 0.0
        %388 = vmatmul.mubr.f32.gmra.mrb[0].mxu0 %v321
        %v389 = vpop.f32.mrb[0].mxu0
        %v390 = vadd.f32 0.0, %v389
        %v391 = vpop.f32.mrb[0].mxu0
        %392 = vdwg.mxu0
        %v394 = vsel %vm319, %v390, 0
        %v397 = vsel %vm319, %v316, 0
        %399 = vmatprep.subr.mxu0 0.0
        %400 = vmatpush1.xpose.msra.mxu0 %v397
        %401 = vmatprep.subr.mxu0 0.0
        %402 = vmatpush1.xpose.msra.mxu0 0.0
        %403 = vmatprep.subr.mxu0 0.0
        %404 = vmatpush1.xpose.msra.mxu0 0.0
        %405 = vmatprep.subr.mxu0 0.0
        %406 = vmatpush1.xpose.msra.mxu0 0.0
        %407 = vmatprep.subr.mxu0 0.0
        %408 = vmatpush1.xpose.msra.mxu0 0.0
        %409 = vmatprep.subr.mxu0 0.0
        %410 = vmatpush1.xpose.msra.mxu0 0.0
        %411 = vmatprep.subr.mxu0 0.0
        %412 = vmatpush1.xpose.msra.mxu0 0.0
        %413 = vmatprep.subr.mxu0 0.0
        %414 = vmatpush1.xpose.msra.mxu0 0.0
        %415 = vmatprep.subr.mxu0 0.0
        %416 = vmatpush1.xpose.msra.mxu0 0.0
        %417 = vmatprep.subr.mxu0 0.0
        %418 = vmatpush1.xpose.msra.mxu0 0.0
        %419 = vmatprep.subr.mxu0 0.0
        %420 = vmatpush1.xpose.msra.mxu0 0.0
        %421 = vmatprep.subr.mxu0 0.0
        %422 = vmatpush1.xpose.msra.mxu0 0.0
        %423 = vmatprep.subr.mxu0 0.0
        %424 = vmatpush1.xpose.msra.mxu0 0.0
        %425 = vmatprep.subr.mxu0 0.0
        %426 = vmatpush1.xpose.msra.mxu0 0.0
        %427 = vmatprep.subr.mxu0 0.0
        %428 = vmatpush1.xpose.msra.mxu0 0.0
        %429 = vmatprep.subr.mxu0 0.0
        %430 = vmatpush1.xpose.msra.mxu0 0.0
        %431 = vmatprep.subr.mxu0 0.0
        %432 = vmatpush1.xpose.msra.mxu0 0.0
        %433 = vmatprep.subr.mxu0 0.0
        %434 = vmatpush1.xpose.msra.mxu0 0.0
        %435 = vmatprep.subr.mxu0 0.0
        %436 = vmatpush1.xpose.msra.mxu0 0.0
        %437 = vmatprep.subr.mxu0 0.0
        %438 = vmatpush1.xpose.msra.mxu0 0.0
        %439 = vmatprep.subr.mxu0 0.0
        %440 = vmatpush1.xpose.msra.mxu0 0.0
        %441 = vmatprep.subr.mxu0 0.0
        %442 = vmatpush1.xpose.msra.mxu0 0.0
        %443 = vmatprep.subr.mxu0 0.0
        %444 = vmatpush1.xpose.msra.mxu0 0.0
        %445 = vmatprep.subr.mxu0 0.0
        %446 = vmatpush1.xpose.msra.mxu0 0.0
        %447 = vmatprep.subr.mxu0 0.0
        %448 = vmatpush1.xpose.msra.mxu0 0.0
        %449 = vmatprep.subr.mxu0 0.0
        %450 = vmatpush1.xpose.msra.mxu0 0.0
        %451 = vmatprep.subr.mxu0 0.0
        %452 = vmatpush1.xpose.msra.mxu0 0.0
        %453 = vmatprep.subr.mxu0 0.0
        %454 = vmatpush1.xpose.msra.mxu0 0.0
        %455 = vmatprep.subr.mxu0 0.0
        %456 = vmatpush1.xpose.msra.mxu0 0.0
        %457 = vmatprep.subr.mxu0 0.0
        %458 = vmatpush1.xpose.msra.mxu0 0.0
        %459 = vmatprep.subr.mxu0 0.0
        %460 = vmatpush1.xpose.msra.mxu0 0.0
        %461 = vmatprep.subr.mxu0 0.0
        %462 = vmatpush1.xpose.msra.mxu0 0.0
        %463 = vmatprep.mubr.f32.mxu0 0.0
        %464 = vmatmul.mubr.f32.gmra.mrb[0].mxu0 %v394
        %v465 = vpop.f32.mrb[0].mxu0
        %v466 = vadd.f32 0.0, %v465
        %v467 = vpop.f32.mrb[0].mxu0
        %468 = vdwg.mxu0
        %s469 = scalar_lea.vmem %s273, 16
        %v470 = vld [vmem:[%s469] sm:$0xff]
        %v471 = vld [vmem:[%s469 + $0x8] sm:$0xff]
        %472 = vmatprep.subr.mxu0 0.0
        %473 = vmatpush1.msra.mxu0 %v470
        %474 = vmatprep.subr.mxu0 0.0
        %475 = vmatpush1.msra.mxu0 %v471
        %476 = vmatprep.subr.mxu0 0.0
        %477 = vmatpush1.msra.mxu0 0.0
        %478 = vmatprep.subr.mxu0 0.0
        %479 = vmatpush1.msra.mxu0 0.0
        %480 = vmatprep.subr.mxu0 0.0
        %481 = vmatpush1.msra.mxu0 0.0
        %482 = vmatprep.subr.mxu0 0.0
        %483 = vmatpush1.msra.mxu0 0.0
        %484 = vmatprep.subr.mxu0 0.0
        %485 = vmatpush1.msra.mxu0 0.0
        %486 = vmatprep.subr.mxu0 0.0
        %487 = vmatpush1.msra.mxu0 0.0
        %488 = vmatprep.subr.mxu0 0.0
        %489 = vmatpush1.msra.mxu0 0.0
        %490 = vmatprep.subr.mxu0 0.0
        %491 = vmatpush1.msra.mxu0 0.0
        %492 = vmatprep.subr.mxu0 0.0
        %493 = vmatpush1.msra.mxu0 0.0
        %494 = vmatprep.subr.mxu0 0.0
        %495 = vmatpush1.msra.mxu0 0.0
        %496 = vmatprep.subr.mxu0 0.0
        %497 = vmatpush1.msra.mxu0 0.0
        %498 = vmatprep.subr.mxu0 0.0
        %499 = vmatpush1.msra.mxu0 0.0
        %500 = vmatprep.subr.mxu0 0.0
        %501 = vmatpush1.msra.mxu0 0.0
        %502 = vmatprep.subr.mxu0 0.0
        %503 = vmatpush1.msra.mxu0 0.0
        %504 = vmatprep.subr.mxu0 0.0
        %505 = vmatpush1.msra.mxu0 0.0
        %506 = vmatprep.subr.mxu0 0.0
        %507 = vmatpush1.msra.mxu0 0.0
        %508 = vmatprep.subr.mxu0 0.0
        %509 = vmatpush1.msra.mxu0 0.0
        %510 = vmatprep.subr.mxu0 0.0
        %511 = vmatpush1.msra.mxu0 0.0
        %512 = vmatprep.subr.mxu0 0.0
        %513 = vmatpush1.msra.mxu0 0.0
        %514 = vmatprep.subr.mxu0 0.0
        %515 = vmatpush1.msra.mxu0 0.0
        %516 = vmatprep.subr.mxu0 0.0
        %517 = vmatpush1.msra.mxu0 0.0
        %518 = vmatprep.subr.mxu0 0.0
        %519 = vmatpush1.msra.mxu0 0.0
        %520 = vmatprep.subr.mxu0 0.0
        %521 = vmatpush1.msra.mxu0 0.0
        %522 = vmatprep.subr.mxu0 0.0
        %523 = vmatpush1.msra.mxu0 0.0
        %524 = vmatprep.subr.mxu0 0.0
        %525 = vmatpush1.msra.mxu0 0.0
        %526 = vmatprep.subr.mxu0 0.0
        %527 = vmatpush1.msra.mxu0 0.0
        %528 = vmatprep.subr.mxu0 0.0
        %529 = vmatpush1.msra.mxu0 0.0
        %530 = vmatprep.subr.mxu0 0.0
        %531 = vmatpush1.msra.mxu0 0.0
        %532 = vmatprep.subr.mxu0 0.0
        %533 = vmatpush1.msra.mxu0 0.0
        %534 = vmatprep.subr.mxu0 0.0
        %535 = vmatpush1.msra.mxu0 0.0
        %536 = vmatprep.mubr.f32.mxu0 0.0
        %537 = vmatmul.mubr.f32.gmra.mrb[0].mxu0 %v321
        %v538 = vpop.f32.mrb[0].mxu0
        %v539 = vadd.f32 0.0, %v538
        %v540 = vpop.f32.mrb[0].mxu0
        %541 = vdwg.mxu0
        %v543 = vsel %vm319, %v539, 0
        %545 = vmatprep.subr.mxu0 0.0
        %546 = vmatpush1.xpose.msra.mxu0 %v397
        %547 = vmatprep.subr.mxu0 0.0
        %548 = vmatpush1.xpose.msra.mxu0 0.0
        %549 = vmatprep.subr.mxu0 0.0
        %550 = vmatpush1.xpose.msra.mxu0 0.0
        %551 = vmatprep.subr.mxu0 0.0
        %552 = vmatpush1.xpose.msra.mxu0 0.0
        %553 = vmatprep.subr.mxu0 0.0
        %554 = vmatpush1.xpose.msra.mxu0 0.0
        %555 = vmatprep.subr.mxu0 0.0
        %556 = vmatpush1.xpose.msra.mxu0 0.0
        %557 = vmatprep.subr.mxu0 0.0
        %558 = vmatpush1.xpose.msra.mxu0 0.0
        %559 = vmatprep.subr.mxu0 0.0
        %560 = vmatpush1.xpose.msra.mxu0 0.0
        %561 = vmatprep.subr.mxu0 0.0
        %562 = vmatpush1.xpose.msra.mxu0 0.0
        %563 = vmatprep.subr.mxu0 0.0
        %564 = vmatpush1.xpose.msra.mxu0 0.0
        %565 = vmatprep.subr.mxu0 0.0
        %566 = vmatpush1.xpose.msra.mxu0 0.0
        %567 = vmatprep.subr.mxu0 0.0
        %568 = vmatpush1.xpose.msra.mxu0 0.0
        %569 = vmatprep.subr.mxu0 0.0
        %570 = vmatpush1.xpose.msra.mxu0 0.0
        %571 = vmatprep.subr.mxu0 0.0
        %572 = vmatpush1.xpose.msra.mxu0 0.0
        %573 = vmatprep.subr.mxu0 0.0
        %574 = vmatpush1.xpose.msra.mxu0 0.0
        %575 = vmatprep.subr.mxu0 0.0
        %576 = vmatpush1.xpose.msra.mxu0 0.0
        %577 = vmatprep.subr.mxu0 0.0
        %578 = vmatpush1.xpose.msra.mxu0 0.0
        %579 = vmatprep.subr.mxu0 0.0
        %580 = vmatpush1.xpose.msra.mxu0 0.0
        %581 = vmatprep.subr.mxu0 0.0
        %582 = vmatpush1.xpose.msra.mxu0 0.0
        %583 = vmatprep.subr.mxu0 0.0
        %584 = vmatpush1.xpose.msra.mxu0 0.0
        %585 = vmatprep.subr.mxu0 0.0
        %586 = vmatpush1.xpose.msra.mxu0 0.0
        %587 = vmatprep.subr.mxu0 0.0
        %588 = vmatpush1.xpose.msra.mxu0 0.0
        %589 = vmatprep.subr.mxu0 0.0
        %590 = vmatpush1.xpose.msra.mxu0 0.0
        %591 = vmatprep.subr.mxu0 0.0
        %592 = vmatpush1.xpose.msra.mxu0 0.0
        %593 = vmatprep.subr.mxu0 0.0
        %594 = vmatpush1.xpose.msra.mxu0 0.0
        %595 = vmatprep.subr.mxu0 0.0
        %596 = vmatpush1.xpose.msra.mxu0 0.0
        %597 = vmatprep.subr.mxu0 0.0
        %598 = vmatpush1.xpose.msra.mxu0 0.0
        %599 = vmatprep.subr.mxu0 0.0
        %600 = vmatpush1.xpose.msra.mxu0 0.0
        %601 = vmatprep.subr.mxu0 0.0
        %602 = vmatpush1.xpose.msra.mxu0 0.0
        %603 = vmatprep.subr.mxu0 0.0
        %604 = vmatpush1.xpose.msra.mxu0 0.0
        %605 = vmatprep.subr.mxu0 0.0
        %606 = vmatpush1.xpose.msra.mxu0 0.0
        %607 = vmatprep.subr.mxu0 0.0
        %608 = vmatpush1.xpose.msra.mxu0 0.0
        %609 = vmatprep.mubr.f32.mxu0 0.0
        %610 = vmatmul.mubr.f32.gmra.mrb[0].mxu0 %v543
        %v611 = vpop.f32.mrb[0].mxu0
        %v612 = vadd.f32 0.0, %v611
        %v613 = vpop.f32.mrb[0].mxu0
        %614 = vdwg.mxu0
        %s615 = scalar_lea.vmem %s273, 32
        %v616 = vld [vmem:[%s615] sm:$0xff]
        %v617 = vld [vmem:[%s615 + $0x8] sm:$0xff]
        %618 = vmatprep.subr.mxu0 0.0
        %619 = vmatpush1.msra.mxu0 %v616
        %620 = vmatprep.subr.mxu0 0.0
        %621 = vmatpush1.msra.mxu0 %v617
        %622 = vmatprep.subr.mxu0 0.0
        %623 = vmatpush1.msra.mxu0 0.0
        %624 = vmatprep.subr.mxu0 0.0
        %625 = vmatpush1.msra.mxu0 0.0
        %626 = vmatprep.subr.mxu0 0.0
        %627 = vmatpush1.msra.mxu0 0.0
        %628 = vmatprep.subr.mxu0 0.0
        %629 = vmatpush1.msra.mxu0 0.0
        %630 = vmatprep.subr.mxu0 0.0
        %631 = vmatpush1.msra.mxu0 0.0
        %632 = vmatprep.subr.mxu0 0.0
        %633 = vmatpush1.msra.mxu0 0.0
        %634 = vmatprep.subr.mxu0 0.0
        %635 = vmatpush1.msra.mxu0 0.0
        %636 = vmatprep.subr.mxu0 0.0
        %637 = vmatpush1.msra.mxu0 0.0
        %638 = vmatprep.subr.mxu0 0.0
        %639 = vmatpush1.msra.mxu0 0.0
        %640 = vmatprep.subr.mxu0 0.0
        %641 = vmatpush1.msra.mxu0 0.0
        %642 = vmatprep.subr.mxu0 0.0
        %643 = vmatpush1.msra.mxu0 0.0
        %644 = vmatprep.subr.mxu0 0.0
        %645 = vmatpush1.msra.mxu0 0.0
        %646 = vmatprep.subr.mxu0 0.0
        %647 = vmatpush1.msra.mxu0 0.0
        %648 = vmatprep.subr.mxu0 0.0
        %649 = vmatpush1.msra.mxu0 0.0
        %650 = vmatprep.subr.mxu0 0.0
        %651 = vmatpush1.msra.mxu0 0.0
        %652 = vmatprep.subr.mxu0 0.0
        %653 = vmatpush1.msra.mxu0 0.0
        %654 = vmatprep.subr.mxu0 0.0
        %655 = vmatpush1.msra.mxu0 0.0
        %656 = vmatprep.subr.mxu0 0.0
        %657 = vmatpush1.msra.mxu0 0.0
        %658 = vmatprep.subr.mxu0 0.0
        %659 = vmatpush1.msra.mxu0 0.0
        %660 = vmatprep.subr.mxu0 0.0
        %661 = vmatpush1.msra.mxu0 0.0
        %662 = vmatprep.subr.mxu0 0.0
        %663 = vmatpush1.msra.mxu0 0.0
        %664 = vmatprep.subr.mxu0 0.0
        %665 = vmatpush1.msra.mxu0 0.0
        %666 = vmatprep.subr.mxu0 0.0
        %667 = vmatpush1.msra.mxu0 0.0
        %668 = vmatprep.subr.mxu0 0.0
        %669 = vmatpush1.msra.mxu0 0.0
        %670 = vmatprep.subr.mxu0 0.0
        %671 = vmatpush1.msra.mxu0 0.0
        %672 = vmatprep.subr.mxu0 0.0
        %673 = vmatpush1.msra.mxu0 0.0
        %674 = vmatprep.subr.mxu0 0.0
        %675 = vmatpush1.msra.mxu0 0.0
        %676 = vmatprep.subr.mxu0 0.0
        %677 = vmatpush1.msra.mxu0 0.0
        %678 = vmatprep.subr.mxu0 0.0
        %679 = vmatpush1.msra.mxu0 0.0
        %680 = vmatprep.subr.mxu0 0.0
        %681 = vmatpush1.msra.mxu0 0.0
        %682 = vmatprep.mubr.f32.mxu0 0.0
        %683 = vmatmul.mubr.f32.gmra.mrb[0].mxu0 %v321
        %v684 = vpop.f32.mrb[0].mxu0
        %v685 = vadd.f32 0.0, %v684
        %v686 = vpop.f32.mrb[0].mxu0
        %687 = vdwg.mxu0
        %v689 = vsel %vm319, %v685, 0
        %691 = vmatprep.subr.mxu0 0.0
        %692 = vmatpush1.xpose.msra.mxu0 %v397
        %693 = vmatprep.subr.mxu0 0.0
        %694 = vmatpush1.xpose.msra.mxu0 0.0
        %695 = vmatprep.subr.mxu0 0.0
        %696 = vmatpush1.xpose.msra.mxu0 0.0
        %697 = vmatprep.subr.mxu0 0.0
        %698 = vmatpush1.xpose.msra.mxu0 0.0
        %699 = vmatprep.subr.mxu0 0.0
        %700 = vmatpush1.xpose.msra.mxu0 0.0
        %701 = vmatprep.subr.mxu0 0.0
        %702 = vmatpush1.xpose.msra.mxu0 0.0
        %703 = vmatprep.subr.mxu0 0.0
        %704 = vmatpush1.xpose.msra.mxu0 0.0
        %705 = vmatprep.subr.mxu0 0.0
        %706 = vmatpush1.xpose.msra.mxu0 0.0
        %707 = vmatprep.subr.mxu0 0.0
        %708 = vmatpush1.xpose.msra.mxu0 0.0
        %709 = vmatprep.subr.mxu0 0.0
        %710 = vmatpush1.xpose.msra.mxu0 0.0
        %711 = vmatprep.subr.mxu0 0.0
        %712 = vmatpush1.xpose.msra.mxu0 0.0
        %713 = vmatprep.subr.mxu0 0.0
        %714 = vmatpush1.xpose.msra.mxu0 0.0
        %715 = vmatprep.subr.mxu0 0.0
        %716 = vmatpush1.xpose.msra.mxu0 0.0
        %717 = vmatprep.subr.mxu0 0.0
        %718 = vmatpush1.xpose.msra.mxu0 0.0
        %719 = vmatprep.subr.mxu0 0.0
        %720 = vmatpush1.xpose.msra.mxu0 0.0
        %721 = vmatprep.subr.mxu0 0.0
        %722 = vmatpush1.xpose.msra.mxu0 0.0
        %723 = vmatprep.subr.mxu0 0.0
        %724 = vmatpush1.xpose.msra.mxu0 0.0
        %725 = vmatprep.subr.mxu0 0.0
        %726 = vmatpush1.xpose.msra.mxu0 0.0
        %727 = vmatprep.subr.mxu0 0.0
        %728 = vmatpush1.xpose.msra.mxu0 0.0
        %729 = vmatprep.subr.mxu0 0.0
        %730 = vmatpush1.xpose.msra.mxu0 0.0
        %731 = vmatprep.subr.mxu0 0.0
        %732 = vmatpush1.xpose.msra.mxu0 0.0
        %733 = vmatprep.subr.mxu0 0.0
        %734 = vmatpush1.xpose.msra.mxu0 0.0
        %735 = vmatprep.subr.mxu0 0.0
        %736 = vmatpush1.xpose.msra.mxu0 0.0
        %737 = vmatprep.subr.mxu0 0.0
        %738 = vmatpush1.xpose.msra.mxu0 0.0
        %739 = vmatprep.subr.mxu0 0.0
        %740 = vmatpush1.xpose.msra.mxu0 0.0
        %741 = vmatprep.subr.mxu0 0.0
        %742 = vmatpush1.xpose.msra.mxu0 0.0
        %743 = vmatprep.subr.mxu0 0.0
        %744 = vmatpush1.xpose.msra.mxu0 0.0
        %745 = vmatprep.subr.mxu0 0.0
        %746 = vmatpush1.xpose.msra.mxu0 0.0
        %747 = vmatprep.subr.mxu0 0.0
        %748 = vmatpush1.xpose.msra.mxu0 0.0
        %749 = vmatprep.subr.mxu0 0.0
        %750 = vmatpush1.xpose.msra.mxu0 0.0
        %751 = vmatprep.subr.mxu0 0.0
        %752 = vmatpush1.xpose.msra.mxu0 0.0
        %753 = vmatprep.subr.mxu0 0.0
        %754 = vmatpush1.xpose.msra.mxu0 0.0
        %755 = vmatprep.mubr.f32.mxu0 0.0
        %756 = vmatmul.mubr.f32.gmra.mrb[0].mxu0 %v689
        %v757 = vpop.f32.mrb[0].mxu0
        %v758 = vadd.f32 0.0, %v757
        %v759 = vpop.f32.mrb[0].mxu0
        %760 = vdwg.mxu0
        %s761 = scalar_lea.vmem %s273, 48
        %v762 = vld [vmem:[%s761] sm:$0xff]
        %v763 = vld [vmem:[%s761 + $0x8] sm:$0xff]
        %764 = vmatprep.subr.mxu0 0.0
        %765 = vmatpush1.msra.mxu0 %v762
        %766 = vmatprep.subr.mxu0 0.0
        %767 = vmatpush1.msra.mxu0 %v763
        %768 = vmatprep.subr.mxu0 0.0
        %769 = vmatpush1.msra.mxu0 0.0
        %770 = vmatprep.subr.mxu0 0.0
        %771 = vmatpush1.msra.mxu0 0.0
        %772 = vmatprep.subr.mxu0 0.0
        %773 = vmatpush1.msra.mxu0 0.0
        %774 = vmatprep.subr.mxu0 0.0
        %775 = vmatpush1.msra.mxu0 0.0
        %776 = vmatprep.subr.mxu0 0.0
        %777 = vmatpush1.msra.mxu0 0.0
        %778 = vmatprep.subr.mxu0 0.0
        %779 = vmatpush1.msra.mxu0 0.0
        %780 = vmatprep.subr.mxu0 0.0
        %781 = vmatpush1.msra.mxu0 0.0
        %782 = vmatprep.subr.mxu0 0.0
        %783 = vmatpush1.msra.mxu0 0.0
        %784 = vmatprep.subr.mxu0 0.0
        %785 = vmatpush1.msra.mxu0 0.0
        %786 = vmatprep.subr.mxu0 0.0
        %787 = vmatpush1.msra.mxu0 0.0
        %788 = vmatprep.subr.mxu0 0.0
        %789 = vmatpush1.msra.mxu0 0.0
        %790 = vmatprep.subr.mxu0 0.0
        %791 = vmatpush1.msra.mxu0 0.0
        %792 = vmatprep.subr.mxu0 0.0
        %793 = vmatpush1.msra.mxu0 0.0
        %794 = vmatprep.subr.mxu0 0.0
        %795 = vmatpush1.msra.mxu0 0.0
        %796 = vmatprep.subr.mxu0 0.0
        %797 = vmatpush1.msra.mxu0 0.0
        %798 = vmatprep.subr.mxu0 0.0
        %799 = vmatpush1.msra.mxu0 0.0
        %800 = vmatprep.subr.mxu0 0.0
        %801 = vmatpush1.msra.mxu0 0.0
        %802 = vmatprep.subr.mxu0 0.0
        %803 = vmatpush1.msra.mxu0 0.0
        %804 = vmatprep.subr.mxu0 0.0
        %805 = vmatpush1.msra.mxu0 0.0
        %806 = vmatprep.subr.mxu0 0.0
        %807 = vmatpush1.msra.mxu0 0.0
        %808 = vmatprep.subr.mxu0 0.0
        %809 = vmatpush1.msra.mxu0 0.0
        %810 = vmatprep.subr.mxu0 0.0
        %811 = vmatpush1.msra.mxu0 0.0
        %812 = vmatprep.subr.mxu0 0.0
        %813 = vmatpush1.msra.mxu0 0.0
        %814 = vmatprep.subr.mxu0 0.0
        %815 = vmatpush1.msra.mxu0 0.0
        %816 = vmatprep.subr.mxu0 0.0
        %817 = vmatpush1.msra.mxu0 0.0
        %818 = vmatprep.subr.mxu0 0.0
        %819 = vmatpush1.msra.mxu0 0.0
        %820 = vmatprep.subr.mxu0 0.0
        %821 = vmatpush1.msra.mxu0 0.0
        %822 = vmatprep.subr.mxu0 0.0
        %823 = vmatpush1.msra.mxu0 0.0
        %824 = vmatprep.subr.mxu0 0.0
        %825 = vmatpush1.msra.mxu0 0.0
        %826 = vmatprep.subr.mxu0 0.0
        %827 = vmatpush1.msra.mxu0 0.0
        %828 = vmatprep.mubr.f32.mxu0 0.0
        %829 = vmatmul.mubr.f32.gmra.mrb[0].mxu0 %v321
        %v830 = vpop.f32.mrb[0].mxu0
        %v831 = vadd.f32 0.0, %v830
        %v832 = vpop.f32.mrb[0].mxu0
        %833 = vdwg.mxu0
        %v835 = vsel %vm319, %v831, 0
        %837 = vmatprep.subr.mxu0 0.0
        %838 = vmatpush1.xpose.msra.mxu0 %v397
        %839 = vmatprep.subr.mxu0 0.0
        %840 = vmatpush1.xpose.msra.mxu0 0.0
        %841 = vmatprep.subr.mxu0 0.0
        %842 = vmatpush1.xpose.msra.mxu0 0.0
        %843 = vmatprep.subr.mxu0 0.0
        %844 = vmatpush1.xpose.msra.mxu0 0.0
        %845 = vmatprep.subr.mxu0 0.0
        %846 = vmatpush1.xpose.msra.mxu0 0.0
        %847 = vmatprep.subr.mxu0 0.0
        %848 = vmatpush1.xpose.msra.mxu0 0.0
        %849 = vmatprep.subr.mxu0 0.0
        %850 = vmatpush1.xpose.msra.mxu0 0.0
        %851 = vmatprep.subr.mxu0 0.0
        %852 = vmatpush1.xpose.msra.mxu0 0.0
        %853 = vmatprep.subr.mxu0 0.0
        %854 = vmatpush1.xpose.msra.mxu0 0.0
        %855 = vmatprep.subr.mxu0 0.0
        %856 = vmatpush1.xpose.msra.mxu0 0.0
        %857 = vmatprep.subr.mxu0 0.0
        %858 = vmatpush1.xpose.msra.mxu0 0.0
        %859 = vmatprep.subr.mxu0 0.0
        %860 = vmatpush1.xpose.msra.mxu0 0.0
        %861 = vmatprep.subr.mxu0 0.0
        %862 = vmatpush1.xpose.msra.mxu0 0.0
        %863 = vmatprep.subr.mxu0 0.0
        %864 = vmatpush1.xpose.msra.mxu0 0.0
        %865 = vmatprep.subr.mxu0 0.0
        %866 = vmatpush1.xpose.msra.mxu0 0.0
        %867 = vmatprep.subr.mxu0 0.0
        %868 = vmatpush1.xpose.msra.mxu0 0.0
        %869 = vmatprep.subr.mxu0 0.0
        %870 = vmatpush1.xpose.msra.mxu0 0.0
        %871 = vmatprep.subr.mxu0 0.0
        %872 = vmatpush1.xpose.msra.mxu0 0.0
        %873 = vmatprep.subr.mxu0 0.0
        %874 = vmatpush1.xpose.msra.mxu0 0.0
        %875 = vmatprep.subr.mxu0 0.0
        %876 = vmatpush1.xpose.msra.mxu0 0.0
        %877 = vmatprep.subr.mxu0 0.0
        %878 = vmatpush1.xpose.msra.mxu0 0.0
        %879 = vmatprep.subr.mxu0 0.0
        %880 = vmatpush1.xpose.msra.mxu0 0.0
        %881 = vmatprep.subr.mxu0 0.0
        %882 = vmatpush1.xpose.msra.mxu0 0.0
        %883 = vmatprep.subr.mxu0 0.0
        %884 = vmatpush1.xpose.msra.mxu0 0.0
        %885 = vmatprep.subr.mxu0 0.0
        %886 = vmatpush1.xpose.msra.mxu0 0.0
        %887 = vmatprep.subr.mxu0 0.0
        %888 = vmatpush1.xpose.msra.mxu0 0.0
        %889 = vmatprep.subr.mxu0 0.0
        %890 = vmatpush1.xpose.msra.mxu0 0.0
        %891 = vmatprep.subr.mxu0 0.0
        %892 = vmatpush1.xpose.msra.mxu0 0.0
        %893 = vmatprep.subr.mxu0 0.0
        %894 = vmatpush1.xpose.msra.mxu0 0.0
        %895 = vmatprep.subr.mxu0 0.0
        %896 = vmatpush1.xpose.msra.mxu0 0.0
        %897 = vmatprep.subr.mxu0 0.0
        %898 = vmatpush1.xpose.msra.mxu0 0.0
        %899 = vmatprep.subr.mxu0 0.0
        %900 = vmatpush1.xpose.msra.mxu0 0.0
        %901 = vmatprep.mubr.f32.mxu0 0.0
        %902 = vmatmul.mubr.f32.gmra.mrb[0].mxu0 %v835
        %v903 = vpop.f32.mrb[0].mxu0
        %v904 = vadd.f32 0.0, %v903
        %v905 = vpop.f32.mrb[0].mxu0
        %906 = vdwg.mxu0
        %v907 = vld [vmem:[%s278] sm:$0xff]
        %v908 = vld [vmem:[%s278 + $0x8] sm:$0xff]
        %909 = vmatprep.subr.mxu0 0.0
        %910 = vmatpush1.msra.mxu0 %v907
        %911 = vmatprep.subr.mxu0 0.0
        %912 = vmatpush1.msra.mxu0 %v908
        %913 = vmatprep.subr.mxu0 0.0
        %914 = vmatpush1.msra.mxu0 0.0
        %915 = vmatprep.subr.mxu0 0.0
        %916 = vmatpush1.msra.mxu0 0.0
        %917 = vmatprep.subr.mxu0 0.0
        %918 = vmatpush1.msra.mxu0 0.0
        %919 = vmatprep.subr.mxu0 0.0
        %920 = vmatpush1.msra.mxu0 0.0
        %921 = vmatprep.subr.mxu0 0.0
        %922 = vmatpush1.msra.mxu0 0.0
        %923 = vmatprep.subr.mxu0 0.0
        %924 = vmatpush1.msra.mxu0 0.0
        %925 = vmatprep.subr.mxu0 0.0
        %926 = vmatpush1.msra.mxu0 0.0
        %927 = vmatprep.subr.mxu0 0.0
        %928 = vmatpush1.msra.mxu0 0.0
        %929 = vmatprep.subr.mxu0 0.0
        %930 = vmatpush1.msra.mxu0 0.0
        %931 = vmatprep.subr.mxu0 0.0
        %932 = vmatpush1.msra.mxu0 0.0
        %933 = vmatprep.subr.mxu0 0.0
        %934 = vmatpush1.msra.mxu0 0.0
        %935 = vmatprep.subr.mxu0 0.0
        %936 = vmatpush1.msra.mxu0 0.0
        %937 = vmatprep.subr.mxu0 0.0
        %938 = vmatpush1.msra.mxu0 0.0
        %939 = vmatprep.subr.mxu0 0.0
        %940 = vmatpush1.msra.mxu0 0.0
        %941 = vmatprep.subr.mxu0 0.0
        %942 = vmatpush1.msra.mxu0 0.0
        %943 = vmatprep.subr.mxu0 0.0
        %944 = vmatpush1.msra.mxu0 0.0
        %945 = vmatprep.subr.mxu0 0.0
        %946 = vmatpush1.msra.mxu0 0.0
        %947 = vmatprep.subr.mxu0 0.0
        %948 = vmatpush1.msra.mxu0 0.0
        %949 = vmatprep.subr.mxu0 0.0
        %950 = vmatpush1.msra.mxu0 0.0
        %951 = vmatprep.subr.mxu0 0.0
        %952 = vmatpush1.msra.mxu0 0.0
        %953 = vmatprep.subr.mxu0 0.0
        %954 = vmatpush1.msra.mxu0 0.0
        %955 = vmatprep.subr.mxu0 0.0
        %956 = vmatpush1.msra.mxu0 0.0
        %957 = vmatprep.subr.mxu0 0.0
        %958 = vmatpush1.msra.mxu0 0.0
        %959 = vmatprep.subr.mxu0 0.0
        %960 = vmatpush1.msra.mxu0 0.0
        %961 = vmatprep.subr.mxu0 0.0
        %962 = vmatpush1.msra.mxu0 0.0
        %963 = vmatprep.subr.mxu0 0.0
        %964 = vmatpush1.msra.mxu0 0.0
        %965 = vmatprep.subr.mxu0 0.0
        %966 = vmatpush1.msra.mxu0 0.0
        %967 = vmatprep.subr.mxu0 0.0
        %968 = vmatpush1.msra.mxu0 0.0
        %969 = vmatprep.subr.mxu0 0.0
        %970 = vmatpush1.msra.mxu0 0.0
        %971 = vmatprep.subr.mxu0 0.0
        %972 = vmatpush1.msra.mxu0 0.0
        %973 = vmatprep.mubr.f32.mxu0 0.0
        %974 = vmatmul.mubr.f32.gmra.mrb[0].mxu0 %v321
        %v975 = vpop.f32.mrb[0].mxu0
        %v976 = vadd.f32 0.0, %v975
        %v977 = vpop.f32.mrb[0].mxu0
        %978 = vdwg.mxu0
        %v980 = vsel %vm319, %v976, 0
        %982 = vmatprep.subr.mxu0 0.0
        %983 = vmatpush1.xpose.msra.mxu0 %v397
        %984 = vmatprep.subr.mxu0 0.0
        %985 = vmatpush1.xpose.msra.mxu0 0.0
        %986 = vmatprep.subr.mxu0 0.0
        %987 = vmatpush1.xpose.msra.mxu0 0.0
        %988 = vmatprep.subr.mxu0 0.0
        %989 = vmatpush1.xpose.msra.mxu0 0.0
        %990 = vmatprep.subr.mxu0 0.0
        %991 = vmatpush1.xpose.msra.mxu0 0.0
        %992 = vmatprep.subr.mxu0 0.0
        %993 = vmatpush1.xpose.msra.mxu0 0.0
        %994 = vmatprep.subr.mxu0 0.0
        %995 = vmatpush1.xpose.msra.mxu0 0.0
        %996 = vmatprep.subr.mxu0 0.0
        %997 = vmatpush1.xpose.msra.mxu0 0.0
        %998 = vmatprep.subr.mxu0 0.0
        %999 = vmatpush1.xpose.msra.mxu0 0.0
        %1000 = vmatprep.subr.mxu0 0.0
        %1001 = vmatpush1.xpose.msra.mxu0 0.0
        %1002 = vmatprep.subr.mxu0 0.0
        %1003 = vmatpush1.xpose.msra.mxu0 0.0
        %1004 = vmatprep.subr.mxu0 0.0
        %1005 = vmatpush1.xpose.msra.mxu0 0.0
        %1006 = vmatprep.subr.mxu0 0.0
        %1007 = vmatpush1.xpose.msra.mxu0 0.0
        %1008 = vmatprep.subr.mxu0 0.0
        %1009 = vmatpush1.xpose.msra.mxu0 0.0
        %1010 = vmatprep.subr.mxu0 0.0
        %1011 = vmatpush1.xpose.msra.mxu0 0.0
        %1012 = vmatprep.subr.mxu0 0.0
        %1013 = vmatpush1.xpose.msra.mxu0 0.0
        %1014 = vmatprep.subr.mxu0 0.0
        %1015 = vmatpush1.xpose.msra.mxu0 0.0
        %1016 = vmatprep.subr.mxu0 0.0
        %1017 = vmatpush1.xpose.msra.mxu0 0.0
        %1018 = vmatprep.subr.mxu0 0.0
        %1019 = vmatpush1.xpose.msra.mxu0 0.0
        %1020 = vmatprep.subr.mxu0 0.0
        %1021 = vmatpush1.xpose.msra.mxu0 0.0
        %1022 = vmatprep.subr.mxu0 0.0
        %1023 = vmatpush1.xpose.msra.mxu0 0.0
        %1024 = vmatprep.subr.mxu0 0.0
        %1025 = vmatpush1.xpose.msra.mxu0 0.0
        %1026 = vmatprep.subr.mxu0 0.0
        %1027 = vmatpush1.xpose.msra.mxu0 0.0
        %1028 = vmatprep.subr.mxu0 0.0
        %1029 = vmatpush1.xpose.msra.mxu0 0.0
        %1030 = vmatprep.subr.mxu0 0.0
        %1031 = vmatpush1.xpose.msra.mxu0 0.0
        %1032 = vmatprep.subr.mxu0 0.0
        %1033 = vmatpush1.xpose.msra.mxu0 0.0
        %1034 = vmatprep.subr.mxu0 0.0
        %1035 = vmatpush1.xpose.msra.mxu0 0.0
        %1036 = vmatprep.subr.mxu0 0.0
        %1037 = vmatpush1.xpose.msra.mxu0 0.0
        %1038 = vmatprep.subr.mxu0 0.0
        %1039 = vmatpush1.xpose.msra.mxu0 0.0
        %1040 = vmatprep.subr.mxu0 0.0
        %1041 = vmatpush1.xpose.msra.mxu0 0.0
        %1042 = vmatprep.subr.mxu0 0.0
        %1043 = vmatpush1.xpose.msra.mxu0 0.0
        %1044 = vmatprep.subr.mxu0 0.0
        %1045 = vmatpush1.xpose.msra.mxu0 0.0
        %1046 = vmatprep.mubr.f32.mxu0 0.0
        %1047 = vmatmul.mubr.f32.gmra.mrb[0].mxu0 %v980
        %v1048 = vpop.f32.mrb[0].mxu0
        %v1049 = vadd.f32 0.0, %v1048
        %v1050 = vpop.f32.mrb[0].mxu0
        %1051 = vdwg.mxu0
        %v1052 = vld [vmem:[%s3] sm:$0x1f]
        %v1053 = vld [vmem:[%s4] sm:$0x1]
        %v1054 = vld [vmem:[%s5] sm:$0xff]
        %v1055 = vld [vmem:[#allocation4] sm:$0x1]
        %s1057 = vtos %v1052
        %v1058 = vstv %s1057
        %v1060 = vmul.f32 %v1058, %v466
        %v1062 = vlaneseq
        %v1063 = vshrl.u32 %v1062, 7
        %v1064 = vsub.s32 0, %v1063
        %v1065 = vrot.slane %v1053, %v1064
        %1066 = vset.pattern.permute.xlu0 0
        %1067 = vperm.xlu0 %1066, %v1065
        %v1068 = vpop.permute.xlu0 %1067
        %v1070 = vadd.f32 %v1068, %v1060
        %v1071 = vrot.slane %v1052, 1
        %s1072 = vtos %v1071
        %v1073 = vstv %s1072
        %v1075 = vmul.f32 %v1073, %v612
        %v1076 = vadd.f32 %v1070, %v1075
        %v1077 = vrot.slane %v1052, 2
        %s1078 = vtos %v1077
        %v1079 = vstv %s1078
        %v1081 = vmul.f32 %v1079, %v758
        %v1082 = vadd.f32 %v1076, %v1081
        %v1083 = vrot.slane %v1052, 3
        %s1084 = vtos %v1083
        %v1085 = vstv %s1084
        %v1087 = vmul.f32 %v1085, %v904
        %v1088 = vadd.f32 %v1082, %v1087
        %v1089 = vrot.slane %v1052, 4
        %s1090 = vtos %v1089
        %v1091 = vstv %s1090
        %v1093 = vmul.f32 %v1091, %v1049
        %v1094 = vadd.f32 %v1088, %v1093
        %v1095 = vmax.f32 %v1094, 0.0
        %s1097 = vtos %v1054
        %v1098 = vstv %s1097
        %v1100 = vmul.f32 %v1098, %v1095
        %v1102 = vlaneseq
        %v1103 = vshrl.u32 %v1102, 7
        %v1104 = vsub.s32 0, %v1103
        %v1105 = vrot.slane %v1055, %v1104
        %1106 = vset.pattern.permute.xlu0 0
        %1107 = vperm.xlu0 %1106, %v1105
        %v1108 = vpop.permute.xlu0 %1107
        %v1110 = vadd.f32 %v1108, %v1100
        %1111 = vrot.lane.b32.xlu0 %v1052, 127
        %v1112 = vpop.permute.xlu0 %1111
        %s1113 = vtos %v1112
        %v1114 = vstv %s1113
        %v1116 = vmul.f32 %v1114, %v466
        %1117 = vset.pattern.permute.xlu0 1
        %1118 = vperm.xlu0 %1117, %v1065
        %v1119 = vpop.permute.xlu0 %1118
        %v1121 = vadd.f32 %v1119, %v1116
        %1122 = vrot.lane.b32.xlu0 %v1071, 127
        %v1123 = vpop.permute.xlu0 %1122
        %s1124 = vtos %v1123
        %v1125 = vstv %s1124
        %v1127 = vmul.f32 %v1125, %v612
        %v1128 = vadd.f32 %v1121, %v1127
        %1129 = vrot.lane.b32.xlu0 %v1077, 127
        %v1130 = vpop.permute.xlu0 %1129
        %s1131 = vtos %v1130
        %v1132 = vstv %s1131
        %v1134 = vmul.f32 %v1132, %v758
        %v1135 = vadd.f32 %v1128, %v1134
        %1136 = vrot.lane.b32.xlu0 %v1083, 127
        %v1137 = vpop.permute.xlu0 %1136
        %s1138 = vtos %v1137
        %v1139 = vstv %s1138
        %v1141 = vmul.f32 %v1139, %v904
        %v1142 = vadd.f32 %v1135, %v1141
        %1143 = vrot.lane.b32.xlu0 %v1089, 127
        %v1144 = vpop.permute.xlu0 %1143
        %s1145 = vtos %v1144
        %v1146 = vstv %s1145
        %v1148 = vmul.f32 %v1146, %v1049
        %v1149 = vadd.f32 %v1142, %v1148
        %v1150 = vmax.f32 %v1149, 0.0
        %v1151 = vrot.slane %v1054, 1
        %s1152 = vtos %v1151
        %v1153 = vstv %s1152
        %v1155 = vmul.f32 %v1153, %v1150
        %v1156 = vadd.f32 %v1110, %v1155
        %1157 = vrot.lane.b32.xlu0 %v1052, 126
        %v1158 = vpop.permute.xlu0 %1157
        %s1159 = vtos %v1158
        %v1160 = vstv %s1159
        %v1162 = vmul.f32 %v1160, %v466
        %1163 = vset.pattern.permute.xlu0 2
        %1164 = vperm.xlu0 %1163, %v1065
        %v1165 = vpop.permute.xlu0 %1164
        %v1167 = vadd.f32 %v1165, %v1162
        %1168 = vrot.lane.b32.xlu0 %v1071, 126
        %v1169 = vpop.permute.xlu0 %1168
        %s1170 = vtos %v1169
        %v1171 = vstv %s1170
        %v1173 = vmul.f32 %v1171, %v612
        %v1174 = vadd.f32 %v1167, %v1173
        %1175 = vrot.lane.b32.xlu0 %v1077, 126
        %v1176 = vpop.permute.xlu0 %1175
        %s1177 = vtos %v1176
        %v1178 = vstv %s1177
        %v1180 = vmul.f32 %v1178, %v758
        %v1181 = vadd.f32 %v1174, %v1180
        %1182 = vrot.lane.b32.xlu0 %v1083, 126
        %v1183 = vpop.permute.xlu0 %1182
        %s1184 = vtos %v1183
        %v1185 = vstv %s1184
        %v1187 = vmul.f32 %v1185, %v904
        %v1188 = vadd.f32 %v1181, %v1187
        %1189 = vrot.lane.b32.xlu0 %v1089, 126
        %v1190 = vpop.permute.xlu0 %1189
        %s1191 = vtos %v1190
        %v1192 = vstv %s1191
        %v1194 = vmul.f32 %v1192, %v1049
        %v1195 = vadd.f32 %v1188, %v1194
        %v1196 = vmax.f32 %v1195, 0.0
        %v1197 = vrot.slane %v1054, 2
        %s1198 = vtos %v1197
        %v1199 = vstv %s1198
        %v1201 = vmul.f32 %v1199, %v1196
        %v1202 = vadd.f32 %v1156, %v1201
        %1203 = vrot.lane.b32.xlu0 %v1052, 125
        %v1204 = vpop.permute.xlu0 %1203
        %s1205 = vtos %v1204
        %v1206 = vstv %s1205
        %v1208 = vmul.f32 %v1206, %v466
        %1209 = vset.pattern.permute.xlu0 3
        %1210 = vperm.xlu0 %1209, %v1065
        %v1211 = vpop.permute.xlu0 %1210
        %v1213 = vadd.f32 %v1211, %v1208
        %1214 = vrot.lane.b32.xlu0 %v1071, 125
        %v1215 = vpop.permute.xlu0 %1214
        %s1216 = vtos %v1215
        %v1217 = vstv %s1216
        %v1219 = vmul.f32 %v1217, %v612
        %v1220 = vadd.f32 %v1213, %v1219
        %1221 = vrot.lane.b32.xlu0 %v1077, 125
        %v1222 = vpop.permute.xlu0 %1221
        %s1223 = vtos %v1222
        %v1224 = vstv %s1223
        %v1226 = vmul.f32 %v1224, %v758
        %v1227 = vadd.f32 %v1220, %v1226
        %1228 = vrot.lane.b32.xlu0 %v1083, 125
        %v1229 = vpop.permute.xlu0 %1228
        %s1230 = vtos %v1229
        %v1231 = vstv %s1230
        %v1233 = vmul.f32 %v1231, %v904
        %v1234 = vadd.f32 %v1227, %v1233
        %1235 = vrot.lane.b32.xlu0 %v1089, 125
        %v1236 = vpop.permute.xlu0 %1235
        %s1237 = vtos %v1236
        %v1238 = vstv %s1237
        %v1240 = vmul.f32 %v1238, %v1049
        %v1241 = vadd.f32 %v1234, %v1240
        %v1242 = vmax.f32 %v1241, 0.0
        %v1243 = vrot.slane %v1054, 3
        %s1244 = vtos %v1243
        %v1245 = vstv %s1244
        %v1247 = vmul.f32 %v1245, %v1242
        %v1248 = vadd.f32 %v1202, %v1247
        %1249 = vrot.lane.b32.xlu0 %v1052, 124
        %v1250 = vpop.permute.xlu0 %1249
        %s1251 = vtos %v1250
        %v1252 = vstv %s1251
        %v1254 = vmul.f32 %v1252, %v466
        %1255 = vset.pattern.permute.xlu0 4
        %1256 = vperm.xlu0 %1255, %v1065
        %v1257 = vpop.permute.xlu0 %1256
        %v1259 = vadd.f32 %v1257, %v1254
        %1260 = vrot.lane.b32.xlu0 %v1071, 124
        %v1261 = vpop.permute.xlu0 %1260
        %s1262 = vtos %v1261
        %v1263 = vstv %s1262
        %v1265 = vmul.f32 %v1263, %v612
        %v1266 = vadd.f32 %v1259, %v1265
        %1267 = vrot.lane.b32.xlu0 %v1077, 124
        %v1268 = vpop.permute.xlu0 %1267
        %s1269 = vtos %v1268
        %v1270 = vstv %s1269
        %v1272 = vmul.f32 %v1270, %v758
        %v1273 = vadd.f32 %v1266, %v1272
        %1274 = vrot.lane.b32.xlu0 %v1083, 124
        %v1275 = vpop.permute.xlu0 %1274
        %s1276 = vtos %v1275
        %v1277 = vstv %s1276
        %v1279 = vmul.f32 %v1277, %v904
        %v1280 = vadd.f32 %v1273, %v1279
        %1281 = vrot.lane.b32.xlu0 %v1089, 124
        %v1282 = vpop.permute.xlu0 %1281
        %s1283 = vtos %v1282
        %v1284 = vstv %s1283
        %v1286 = vmul.f32 %v1284, %v1049
        %v1287 = vadd.f32 %v1280, %v1286
        %v1288 = vmax.f32 %v1287, 0.0
        %v1289 = vrot.slane %v1054, 4
        %s1290 = vtos %v1289
        %v1291 = vstv %s1290
        %v1293 = vmul.f32 %v1291, %v1288
        %v1294 = vadd.f32 %v1248, %v1293
        %1295 = vrot.lane.b32.xlu0 %v1052, 123
        %v1296 = vpop.permute.xlu0 %1295
        %s1297 = vtos %v1296
        %v1298 = vstv %s1297
        %v1300 = vmul.f32 %v1298, %v466
        %1301 = vset.pattern.permute.xlu0 5
        %1302 = vperm.xlu0 %1301, %v1065
        %v1303 = vpop.permute.xlu0 %1302
        %v1305 = vadd.f32 %v1303, %v1300
        %1306 = vrot.lane.b32.xlu0 %v1071, 123
        %v1307 = vpop.permute.xlu0 %1306
        %s1308 = vtos %v1307
        %v1309 = vstv %s1308
        %v1311 = vmul.f32 %v1309, %v612
        %v1312 = vadd.f32 %v1305, %v1311
        %1313 = vrot.lane.b32.xlu0 %v1077, 123
        %v1314 = vpop.permute.xlu0 %1313
        %s1315 = vtos %v1314
        %v1316 = vstv %s1315
        %v1318 = vmul.f32 %v1316, %v758
        %v1319 = vadd.f32 %v1312, %v1318
        %1320 = vrot.lane.b32.xlu0 %v1083, 123
        %v1321 = vpop.permute.xlu0 %1320
        %s1322 = vtos %v1321
        %v1323 = vstv %s1322
        %v1325 = vmul.f32 %v1323, %v904
        %v1326 = vadd.f32 %v1319, %v1325
        %1327 = vrot.lane.b32.xlu0 %v1089, 123
        %v1328 = vpop.permute.xlu0 %1327
        %s1329 = vtos %v1328
        %v1330 = vstv %s1329
        %v1332 = vmul.f32 %v1330, %v1049
        %v1333 = vadd.f32 %v1326, %v1332
        %v1334 = vmax.f32 %v1333, 0.0
        %v1335 = vrot.slane %v1054, 5
        %s1336 = vtos %v1335
        %v1337 = vstv %s1336
        %v1339 = vmul.f32 %v1337, %v1334
        %v1340 = vadd.f32 %v1294, %v1339
        %1341 = vrot.lane.b32.xlu0 %v1052, 122
        %v1342 = vpop.permute.xlu0 %1341
        %s1343 = vtos %v1342
        %v1344 = vstv %s1343
        %v1346 = vmul.f32 %v1344, %v466
        %1347 = vset.pattern.permute.xlu0 6
        %1348 = vperm.xlu0 %1347, %v1065
        %v1349 = vpop.permute.xlu0 %1348
        %v1351 = vadd.f32 %v1349, %v1346
        %1352 = vrot.lane.b32.xlu0 %v1071, 122
        %v1353 = vpop.permute.xlu0 %1352
        %s1354 = vtos %v1353
        %v1355 = vstv %s1354
        %v1357 = vmul.f32 %v1355, %v612
        %v1358 = vadd.f32 %v1351, %v1357
        %1359 = vrot.lane.b32.xlu0 %v1077, 122
        %v1360 = vpop.permute.xlu0 %1359
        %s1361 = vtos %v1360
        %v1362 = vstv %s1361
        %v1364 = vmul.f32 %v1362, %v758
        %v1365 = vadd.f32 %v1358, %v1364
        %1366 = vrot.lane.b32.xlu0 %v1083, 122
        %v1367 = vpop.permute.xlu0 %1366
        %s1368 = vtos %v1367
        %v1369 = vstv %s1368
        %v1371 = vmul.f32 %v1369, %v904
        %v1372 = vadd.f32 %v1365, %v1371
        %1373 = vrot.lane.b32.xlu0 %v1089, 122
        %v1374 = vpop.permute.xlu0 %1373
        %s1375 = vtos %v1374
        %v1376 = vstv %s1375
        %v1378 = vmul.f32 %v1376, %v1049
        %v1379 = vadd.f32 %v1372, %v1378
        %v1380 = vmax.f32 %v1379, 0.0
        %v1381 = vrot.slane %v1054, 6
        %s1382 = vtos %v1381
        %v1383 = vstv %s1382
        %v1385 = vmul.f32 %v1383, %v1380
        %v1386 = vadd.f32 %v1340, %v1385
        %1387 = vrot.lane.b32.xlu0 %v1052, 121
        %v1388 = vpop.permute.xlu0 %1387
        %s1389 = vtos %v1388
        %v1390 = vstv %s1389
        %v1392 = vmul.f32 %v1390, %v466
        %1393 = vset.pattern.permute.xlu0 7
        %1394 = vperm.xlu0 %1393, %v1065
        %v1395 = vpop.permute.xlu0 %1394
        %v1397 = vadd.f32 %v1395, %v1392
        %1398 = vrot.lane.b32.xlu0 %v1071, 121
        %v1399 = vpop.permute.xlu0 %1398
        %s1400 = vtos %v1399
        %v1401 = vstv %s1400
        %v1403 = vmul.f32 %v1401, %v612
        %v1404 = vadd.f32 %v1397, %v1403
        %1405 = vrot.lane.b32.xlu0 %v1077, 121
        %v1406 = vpop.permute.xlu0 %1405
        %s1407 = vtos %v1406
        %v1408 = vstv %s1407
        %v1410 = vmul.f32 %v1408, %v758
        %v1411 = vadd.f32 %v1404, %v1410
        %1412 = vrot.lane.b32.xlu0 %v1083, 121
        %v1413 = vpop.permute.xlu0 %1412
        %s1414 = vtos %v1413
        %v1415 = vstv %s1414
        %v1417 = vmul.f32 %v1415, %v904
        %v1418 = vadd.f32 %v1411, %v1417
        %1419 = vrot.lane.b32.xlu0 %v1089, 121
        %v1420 = vpop.permute.xlu0 %1419
        %s1421 = vtos %v1420
        %v1422 = vstv %s1421
        %v1424 = vmul.f32 %v1422, %v1049
        %v1425 = vadd.f32 %v1418, %v1424
        %v1426 = vmax.f32 %v1425, 0.0
        %v1427 = vrot.slane %v1054, 7
        %s1428 = vtos %v1427
        %v1429 = vstv %s1428
        %v1431 = vmul.f32 %v1429, %v1426
        %v1432 = vadd.f32 %v1386, %v1431
        %v1433 = vxor.u32 %v1432, 2147483648
        %v1434 = vmul.f32 %v1433, 1.442695
        %v1435 = vpow.pop %v1434
        %v1436 = vadd.f32 %v1435, 1.0
        %v1437 = vrcp.pop %v1436
        %v1438 = vmul.f32 1.0, %v1437
        %v1439 = vadd.s32 %v290, 8
        %vm1440 = vcmp.ge.s32.totalorder %v290, %v293
        %vm1441 = vcmp.ge.s32.totalorder %v1439, %v293
        %v1442 = vstv %s286
        %vm1443 = vcmp.lt.s32.totalorder %v290, %v1442
        %vm1444 = vcmp.lt.s32.totalorder %v1439, %v1442
        %vm1445 = vmand %vm1440, %vm1443
        %vm1446 = vmand %vm1441, %vm1444
        %v1447 = vmul.u32 %v292, %v296
        %v1448 = vsub.s32 %v290, %v293
        %v1449 = vsub.s32 %v1439, %v293
        %v1450 = vmul.u32 %v1448, 8
        %v1451 = vmul.u32 %v1449, 8
        %vm1452 = vcmp.le.s32.totalorder %v1447, %v1450
        %vm1453 = vcmp.le.s32.totalorder %v1447, %v1451
        %vm1454 = vmand %vm1445, %vm1452
        %vm1455 = vmand %vm1446, %vm1453
        %v1456 = vadd.s32 %v292, 1
        %v1457 = vmul.u32 %v1456, %v296
        %vm1458 = vcmp.lt.s32.totalorder %v1450, %v1457
        %vm1459 = vcmp.lt.s32.totalorder %v1451, %v1457
        %vm1460 = vmand %vm1454, %vm1458
        %vm1461 = vmand %vm1455, %vm1459
        %v1462 = vsel %vm1460, 1, 0
        %v1463 = vsel %vm1461, 1, 0
        %v1464 = vcvt.s32.f32 %v1462
        %v1465 = vcvt.s32.f32 %v1463
        %vm1466 = vcmp.ge.s32.totalorder %v290, %v305
        %vm1467 = vcmp.ge.s32.totalorder %v1439, %v305
        %v1468 = vstv %s284
        %vm1469 = vcmp.lt.s32.totalorder %v290, %v1468
        %vm1470 = vcmp.lt.s32.totalorder %v1439, %v1468
        %vm1471 = vmand %vm1466, %vm1469
        %vm1472 = vmand %vm1467, %vm1470
        %v1473 = vmul.u32 %v292, %v308
        %v1474 = vsub.s32 %v290, %v305
        %v1475 = vsub.s32 %v1439, %v305
        %v1476 = vmul.u32 %v1474, 8
        %v1477 = vmul.u32 %v1475, 8
        %vm1478 = vcmp.le.s32.totalorder %v1473, %v1476
        %vm1479 = vcmp.le.s32.totalorder %v1473, %v1477
        %vm1480 = vmand %vm1471, %vm1478
        %vm1481 = vmand %vm1472, %vm1479
        %v1482 = vmul.u32 %v1456, %v308
        %vm1483 = vcmp.lt.s32.totalorder %v1476, %v1482
        %vm1484 = vcmp.lt.s32.totalorder %v1477, %v1482
        %vm1485 = vmand %vm1480, %vm1483
        %vm1486 = vmand %vm1481, %vm1484
        %v1487 = vsel %vm1485, 1, 0
        %v1488 = vsel %vm1486, 1, 0
        %v1489 = vcvt.s32.f32 %v1487
        %v1490 = vcvt.s32.f32 %v1488
        %vm1491 = vcmask 64512
        %v1493 = vsel %vm1491, %v1464, 0
        %v1496 = vsel %vm1491, %v1465, 0
        %1498 = vmatprep.subr.mxu0 0.0
        %1499 = vmatpush1.msra.mxu0 %v1438
        %1500 = vmatprep.subr.mxu0 0.0
        %1501 = vmatpush1.msra.mxu0 0.0
        %1502 = vmatprep.subr.mxu0 0.0
        %1503 = vmatpush1.msra.mxu0 0.0
        %1504 = vmatprep.subr.mxu0 0.0
        %1505 = vmatpush1.msra.mxu0 0.0
        %1506 = vmatprep.subr.mxu0 0.0
        %1507 = vmatpush1.msra.mxu0 0.0
        %1508 = vmatprep.subr.mxu0 0.0
        %1509 = vmatpush1.msra.mxu0 0.0
        %1510 = vmatprep.subr.mxu0 0.0
        %1511 = vmatpush1.msra.mxu0 0.0
        %1512 = vmatprep.subr.mxu0 0.0
        %1513 = vmatpush1.msra.mxu0 0.0
        %1514 = vmatprep.subr.mxu0 0.0
        %1515 = vmatpush1.msra.mxu0 0.0
        %1516 = vmatprep.subr.mxu0 0.0
        %1517 = vmatpush1.msra.mxu0 0.0
        %1518 = vmatprep.subr.mxu0 0.0
        %1519 = vmatpush1.msra.mxu0 0.0
        %1520 = vmatprep.subr.mxu0 0.0
        %1521 = vmatpush1.msra.mxu0 0.0
        %1522 = vmatprep.subr.mxu0 0.0
        %1523 = vmatpush1.msra.mxu0 0.0
        %1524 = vmatprep.subr.mxu0 0.0
        %1525 = vmatpush1.msra.mxu0 0.0
        %1526 = vmatprep.subr.mxu0 0.0
        %1527 = vmatpush1.msra.mxu0 0.0
        %1528 = vmatprep.subr.mxu0 0.0
        %1529 = vmatpush1.msra.mxu0 0.0
        %1530 = vmatprep.subr.mxu0 0.0
        %1531 = vmatpush1.msra.mxu0 0.0
        %1532 = vmatprep.subr.mxu0 0.0
        %1533 = vmatpush1.msra.mxu0 0.0
        %1534 = vmatprep.subr.mxu0 0.0
        %1535 = vmatpush1.msra.mxu0 0.0
        %1536 = vmatprep.subr.mxu0 0.0
        %1537 = vmatpush1.msra.mxu0 0.0
        %1538 = vmatprep.subr.mxu0 0.0
        %1539 = vmatpush1.msra.mxu0 0.0
        %1540 = vmatprep.subr.mxu0 0.0
        %1541 = vmatpush1.msra.mxu0 0.0
        %1542 = vmatprep.subr.mxu0 0.0
        %1543 = vmatpush1.msra.mxu0 0.0
        %1544 = vmatprep.subr.mxu0 0.0
        %1545 = vmatpush1.msra.mxu0 0.0
        %1546 = vmatprep.subr.mxu0 0.0
        %1547 = vmatpush1.msra.mxu0 0.0
        %1548 = vmatprep.subr.mxu0 0.0
        %1549 = vmatpush1.msra.mxu0 0.0
        %1550 = vmatprep.subr.mxu0 0.0
        %1551 = vmatpush1.msra.mxu0 0.0
        %1552 = vmatprep.subr.mxu0 0.0
        %1553 = vmatpush1.msra.mxu0 0.0
        %1554 = vmatprep.subr.mxu0 0.0
        %1555 = vmatpush1.msra.mxu0 0.0
        %1556 = vmatprep.subr.mxu0 0.0
        %1557 = vmatpush1.msra.mxu0 0.0
        %1558 = vmatprep.subr.mxu0 0.0
        %1559 = vmatpush1.msra.mxu0 0.0
        %1560 = vmatprep.subr.mxu0 0.0
        %1561 = vmatpush1.msra.mxu0 0.0
        %1562 = vmatprep.mubr.f32.mxu0 0.0
        %1563 = vmatmul.mubr.f32.gmra.mrb[0].mxu0 %v1493
        %v1564 = vpop.f32.mrb[0].mxu0
        %v1565 = vadd.f32 0.0, %v1564
        %v1566 = vpop.f32.mrb[0].mxu0
        %1567 = vmatprep.mubr.f32.mxu0 0.0
        %1568 = vmatmul.mubr.f32.gmra.mrb[0].mxu0 %v1496
        %v1569 = vpop.f32.mrb[0].mxu0
        %v1570 = vadd.f32 0.0, %v1569
        %v1571 = vpop.f32.mrb[0].mxu0
        %1572 = vdwg.mxu0
        %v1574 = vsel %vm1491, %v1565, 0
        %v1577 = vsel %vm1491, %v1570, 0
        %v1580 = vsel %vm1491, %v1489, 0
        %v1583 = vsel %vm1491, %v1490, 0
        %1585 = vmatprep.subr.mxu0 0.0
        %1586 = vmatpush1.xpose.msra.mxu0 %v1580
        %1587 = vmatprep.subr.mxu0 0.0
        %1588 = vmatpush1.xpose.msra.mxu0 %v1583
        %1589 = vmatprep.subr.mxu0 0.0
        %1590 = vmatpush1.xpose.msra.mxu0 0.0
        %1591 = vmatprep.subr.mxu0 0.0
        %1592 = vmatpush1.xpose.msra.mxu0 0.0
        %1593 = vmatprep.subr.mxu0 0.0
        %1594 = vmatpush1.xpose.msra.mxu0 0.0
        %1595 = vmatprep.subr.mxu0 0.0
        %1596 = vmatpush1.xpose.msra.mxu0 0.0
        %1597 = vmatprep.subr.mxu0 0.0
        %1598 = vmatpush1.xpose.msra.mxu0 0.0
        %1599 = vmatprep.subr.mxu0 0.0
        %1600 = vmatpush1.xpose.msra.mxu0 0.0
        %1601 = vmatprep.subr.mxu0 0.0
        %1602 = vmatpush1.xpose.msra.mxu0 0.0
        %1603 = vmatprep.subr.mxu0 0.0
        %1604 = vmatpush1.xpose.msra.mxu0 0.0
        %1605 = vmatprep.subr.mxu0 0.0
        %1606 = vmatpush1.xpose.msra.mxu0 0.0
        %1607 = vmatprep.subr.mxu0 0.0
        %1608 = vmatpush1.xpose.msra.mxu0 0.0
        %1609 = vmatprep.subr.mxu0 0.0
        %1610 = vmatpush1.xpose.msra.mxu0 0.0
        %1611 = vmatprep.subr.mxu0 0.0
        %1612 = vmatpush1.xpose.msra.mxu0 0.0
        %1613 = vmatprep.subr.mxu0 0.0
        %1614 = vmatpush1.xpose.msra.mxu0 0.0
        %1615 = vmatprep.subr.mxu0 0.0
        %1616 = vmatpush1.xpose.msra.mxu0 0.0
        %1617 = vmatprep.subr.mxu0 0.0
        %1618 = vmatpush1.xpose.msra.mxu0 0.0
        %1619 = vmatprep.subr.mxu0 0.0
        %1620 = vmatpush1.xpose.msra.mxu0 0.0
        %1621 = vmatprep.subr.mxu0 0.0
        %1622 = vmatpush1.xpose.msra.mxu0 0.0
        %1623 = vmatprep.subr.mxu0 0.0
        %1624 = vmatpush1.xpose.msra.mxu0 0.0
        %1625 = vmatprep.subr.mxu0 0.0
        %1626 = vmatpush1.xpose.msra.mxu0 0.0
        %1627 = vmatprep.subr.mxu0 0.0
        %1628 = vmatpush1.xpose.msra.mxu0 0.0
        %1629 = vmatprep.subr.mxu0 0.0
        %1630 = vmatpush1.xpose.msra.mxu0 0.0
        %1631 = vmatprep.subr.mxu0 0.0
        %1632 = vmatpush1.xpose.msra.mxu0 0.0
        %1633 = vmatprep.subr.mxu0 0.0
        %1634 = vmatpush1.xpose.msra.mxu0 0.0
        %1635 = vmatprep.subr.mxu0 0.0
        %1636 = vmatpush1.xpose.msra.mxu0 0.0
        %1637 = vmatprep.subr.mxu0 0.0
        %1638 = vmatpush1.xpose.msra.mxu0 0.0
        %1639 = vmatprep.subr.mxu0 0.0
        %1640 = vmatpush1.xpose.msra.mxu0 0.0
        %1641 = vmatprep.subr.mxu0 0.0
        %1642 = vmatpush1.xpose.msra.mxu0 0.0
        %1643 = vmatprep.subr.mxu0 0.0
        %1644 = vmatpush1.xpose.msra.mxu0 0.0
        %1645 = vmatprep.subr.mxu0 0.0
        %1646 = vmatpush1.xpose.msra.mxu0 0.0
        %1647 = vmatprep.subr.mxu0 0.0
        %1648 = vmatpush1.xpose.msra.mxu0 0.0
        %1649 = vmatprep.mubr.f32.mxu0 0.0
        %1650 = vmatmul.mubr.f32.gmra.mrb[0].mxu0 %v1574
        %v1651 = vpop.f32.mrb[0].mxu0
        %v1652 = vadd.f32 0.0, %v1651
        %v1653 = vpop.f32.mrb[0].mxu0
        %1654 = vmatprep.mubr.f32.mxu0 0.0
        %1655 = vmatmul.mubr.f32.gmra.mrb[0].mxu0 %v1577
        %v1656 = vpop.f32.mrb[0].mxu0
        %v1657 = vadd.f32 0.0, %v1656
        %v1658 = vpop.f32.mrb[0].mxu0
        %1659 = vdwg.mxu0
        %1660 = vst.msk [vmem:[%s268] sm:$0xff] %vm319, %v1652
        %1661 = vst.msk [vmem:[%s268 + $0x8] sm:$0xff] %vm319, %v1657
        %s1662 = sand.u32 %s173, 1
        %s1663 = scalar_lea.sflag [#allocation6], %s1662
        %s1664 = sand.u32 %s173, 1
        %s1665 = smul.addr %s1664, 16
        %s1666 = scalar_lea.vmem [#allocation5], %s1665
        // Predicated region
        $region45: #{forward.3} parent=43 // pred_check
          %p1667 = pneg %p183
        $region46: #{forward.3} parent=43 // pred_check_branch
          %1669 = sbr.rel (%p1667) target = $region48
        $region47: #{forward.3} parent=43 // pred_region
          %s1671 = ssub.s32 256, 256
          %1672 = vsyncadd %s1663, %s1671
          %s1673 = smul.addr %s29, 2
          %s1674 = smul.addr %s1673, 128
          %s1675 = scalar_lea.hbm %s7, %s1674
          %s1676 = sshll.u32 %s1666, 4
          %s1677 = int_to_ptr.vmem [resolvable:$true] %s1676
          %1682 = dma.vmem_to_hbm [thread:$0]  %s1677, 256, %s1675, %s1663, 128, 128, 8
        $region48: #{forward.3} parent=43 // pred_fallthru
          _
      $region44: #{forward.3} parent=5 // pred_fallthru
        _
      %p1683 = scmp.le.s32.totalorder 2, %s24
      // Predicated region
      $region49: #{forward.3} parent=5 // pred_check
        %p1684 = pneg %p1683
      $region50: #{forward.3} parent=5 // pred_check_branch
        %1686 = sbr.rel (%p1684) target = $region52
      $region51: #{forward.3} parent=5 // pred_region
        %s1687 = ssub.s32 %s24, 2
        // Predicated region
        $region53: #{forward.3} parent=51 // pred_check
          %p1688 = pneg %p189
        $region54: #{forward.3} parent=51 // pred_check_branch
          %1690 = sbr.rel (%p1688) target = $region56
        $region55: #{forward.3} parent=51 // pred_region
          %s1691 = sand.u32 %s174, 1
          %s1692 = scalar_lea.sflag [#allocation6], %s1691
          %s1693 = sand.u32 %s174, 1
          %s1694 = smul.addr %s1693, 16
          %s1695 = scalar_lea.vmem [#allocation5], %s1694
          %1696 = dma.done %s1692, 256
        $region56: #{forward.3} parent=51 // pred_fallthru
          _
      $region52: #{forward.3} parent=5 // pred_fallthru
        _
    $region6: #{forward.3} parent=1 // loop_footer
      %s28 = sadd.s32 1, %s24
    $region7: #{forward.3} parent=1 // loop_footer_branch
      %23 = sbr.rel target = $region3
    $region8: #{forward.3} parent=1 // loop_exit
      _
    %1697 = vsyncpa [#allocation6], 1
    %s1698 = scalar_lea.sflag [#allocation6], 1
    %1699 = vsyncpa %s1698, 1

</llo_original>
